<compile_context>
chip_gen: v7x
topology: tpu7x:2x2x1
jax: 0.10.0
libtpu: 0.0.40
codegen_flags: <defaults>
</compile_context>

<pallas_src>
import jax
import jax.numpy as jnp
from jax.experimental import pallas as pl
from jax.experimental.pallas import tpu as pltpu


def _ffn_kernel(x_ref, w1_ref, b1_ref, w2_ref, b2_ref, o_ref, acc_ref):
    """One (row-tile, H-chunk) grid step of Linear -> GELU -> Linear."""
    h = pl.program_id(1)

    @pl.when(h == 0)
    def _():
        acc_ref[...] = jnp.zeros_like(acc_ref)

    x = x_ref[...]                                      # native (bf16) into MXU
    hid = jnp.dot(x, w1_ref[...], preferred_element_type=jnp.float32)
    hid = hid + b1_ref[...].astype(jnp.float32)         # bias + GELU in f32
    hid = jax.nn.gelu(hid, approximate=True)            # tanh GELU -> EUP slot
    hid = hid.astype(w2_ref.dtype)                      # bf16 back to the MXU
    acc_ref[...] += jnp.dot(hid, w2_ref[...], preferred_element_type=jnp.float32)

    @pl.when(h == pl.num_programs(1) - 1)
    def _():
        y = acc_ref[...] + b2_ref[...].astype(jnp.float32)
        o_ref[...] = y.astype(o_ref.dtype)


def _pick_h_chunk(H, hc):
    """Choose an H-chunk that divides H (bounds the streamed weight slabs)."""
    if hc is not None:
        assert H % hc == 0, "hc must divide H"
        return hc
    if H <= 2048:
        return H
    for cand in range(2048, 127, -128):
        if H % cand == 0:
            return cand
    return H  # fallback: no chunking


def _vmem_limit_bytes(tm, D, hc, n_h, act_bytes, w_bytes, single_buf_weights):
    """Explicit per-generation scoped-VMEM limit (clamped to the chip)."""
    wbuf = 1 if (n_h == 1 and single_buf_weights) else 2
    est = (
        2 * tm * D * act_bytes            # x double-buffer
        + 2 * tm * D * act_bytes          # out double-buffer
        + wbuf * 2 * D * hc * w_bytes     # w1 + w2 chunks
        + wbuf * (hc + D) * 4             # biases
        + tm * D * 4                      # f32 accumulator scratch
        + tm * hc * 4                     # f32 hidden intermediate
        + tm * hc * w_bytes               # bf16 hidden copy
        + tm * D * 4                      # f32 pre-cast output
    )
    try:
        cap = int(getattr(pltpu.get_tpu_info(), "vmem_capacity_bytes", 64 << 20))
    except Exception:
        cap = 64 << 20                    # conservative (v7x-sized) fallback
    limit = int(est * 1.5)
    limit = max(limit, 16 << 20)          # never below v5e's 16 MiB default
    limit = min(limit, int(cap * 0.9))    # leave headroom on the real chip
    return limit


def feed_forward(x, w1, b1, w2, b2, *, tm=512, hc=None):
    """Fused feed-forward over x:[B,T,D]; weights w1:[D,H], w2:[H,D]."""
    B, T, D = x.shape
    H = w1.shape[1]
    N = B * T
    x2d = x.reshape(N, D)

    # Row tile: multiple of 16 (bf16 packs 2 rows/sublane); cap by row count.
    tm = max(16, (int(tm) // 16) * 16)
    tm = min(tm, ((N + 15) // 16) * 16)
    n_row_tiles = pl.cdiv(N, tm)          # partial last block handled by Pallas

    hc = _pick_h_chunk(H, hc)
    n_h = H // hc
    grid = (n_row_tiles, n_h)

    act_bytes = jnp.dtype(x.dtype).itemsize
    w_bytes = jnp.dtype(w1.dtype).itemsize

    def build_and_run(single_buf_weights):
        wkw = {}
        if single_buf_weights and n_h == 1:
            # Constant block index -> no re-DMA ever needed; single buffer.
            wkw = dict(pipeline_mode=pl.Buffered(1))
        in_specs = [
            pl.BlockSpec((tm, D), lambda i, h: (i, 0)),          # streamed x
            pl.BlockSpec((D, hc), lambda i, h: (0, h), **wkw),   # w1 chunk
            pl.BlockSpec((1, hc), lambda i, h: (0, h), **wkw),   # b1 chunk
            pl.BlockSpec((hc, D), lambda i, h: (h, 0), **wkw),   # w2 chunk
            pl.BlockSpec((1, D), lambda i, h: (0, 0), **wkw),    # b2
        ]
        out_specs = pl.BlockSpec((tm, D), lambda i, h: (i, 0))
        vmem_limit = _vmem_limit_bytes(tm, D, hc, n_h, act_bytes, w_bytes,
                                       single_buf_weights)
        return pl.pallas_call(
            _ffn_kernel,
            out_shape=jax.ShapeDtypeStruct((N, D), x.dtype),
            grid_spec=pltpu.PrefetchScalarGridSpec(
                num_scalar_prefetch=0,
                grid=grid,
                in_specs=in_specs,
                out_specs=out_specs,
                scratch_shapes=[pltpu.VMEM((tm, D), jnp.float32)],
            ),
            compiler_params=pltpu.CompilerParams(
                # Row axis independent (megacore-shardable); H axis is the
                # reduction -> must be "arbitrary".
                dimension_semantics=("parallel", "arbitrary"),
                vmem_limit_bytes=vmem_limit,
            ),
        )(x2d, w1, b1, w2, b2)

    try:
        out2d = build_and_run(single_buf_weights=True)
    except Exception:
        # pipeline_mode=pl.Buffered(1) unsupported on this jax version:
        # fall back to default double-buffered weights (correctness identical).
        out2d = build_and_run(single_buf_weights=False)

    return out2d.reshape(B, T, D)


def reference_ffn(x, w1, b1, w2, b2):
    """Pure-JAX reference mirroring the kernel's dtype policy."""
    B, T, D = x.shape
    h = jnp.dot(x.reshape(-1, D), w1, preferred_element_type=jnp.float32)
    h = h + b1.astype(jnp.float32)
    h = jax.nn.gelu(h, approximate=True)
    h = h.astype(w2.dtype)
    y = jnp.dot(h, w2, preferred_element_type=jnp.float32)
    y = y + b2.astype(jnp.float32)
    return y.astype(x.dtype).reshape(B, T, D)


if __name__ == "__main__":
    # Small, lane-dense demo shapes (D, H multiples of 128).  N = B*T = 100 is
    # deliberately NOT a multiple of the row tile, and tm=64 is passed so the
    # run exercises >1 grid step plus the masked partial last block.  For real
    # model shapes use the default tm=512 (and the automatic H-chunking).
    B, T, D, H = 2, 50, 128, 256

    key = jax.random.PRNGKey(0)
    kx, kw1, kb1, kw2, kb2 = jax.random.split(key, 5)

    x = jax.random.normal(kx, (B, T, D), dtype=jnp.float32).astype(jnp.bfloat16)
    # Deterministic synthetic parameters (not a checkpoint load).
    w1 = (jax.random.normal(kw1, (D, H), dtype=jnp.float32)
          * (1.0 / jnp.sqrt(D))).astype(jnp.bfloat16)
    b1 = jax.random.normal(kb1, (1, H), dtype=jnp.float32) * 0.01
    w2 = (jax.random.normal(kw2, (H, D), dtype=jnp.float32)
          * (1.0 / jnp.sqrt(H))).astype(jnp.bfloat16)
    b2 = jax.random.normal(kb2, (1, D), dtype=jnp.float32) * 0.01

    out = feed_forward(x, w1, b1, w2, b2, tm=64)
    out = jax.block_until_ready(out)

    ref = reference_ffn(x, w1, b1, w2, b2)
    assert out.shape == (B, T, D), out.shape
    assert jnp.allclose(out.astype(jnp.float32), ref.astype(jnp.float32),
                        atol=1e-1, rtol=2e-2), "mismatch vs reference"

    print("KERNEL_OK")
</pallas_src>

<mosaic_0001>
module attributes {stable_mosaic.version = 11 : i64} {
  func.func @_ffn_kernel(%arg0: i32, %arg1: i32, %arg2: memref<64x128xbf16, #tpu.memory_space<vmem>>, %arg3: memref<128x256xbf16, #tpu.memory_space<vmem>>, %arg4: memref<1x256xf32, #tpu.memory_space<vmem>>, %arg5: memref<256x128xbf16, #tpu.memory_space<vmem>>, %arg6: memref<1x128xf32, #tpu.memory_space<vmem>>, %arg7: memref<64x128xbf16, #tpu.memory_space<vmem>>, %arg8: memref<64x128xf32, #tpu.memory_space<vmem>>) attributes {dimension_semantics = [#tpu.dimension_semantics<parallel>, #tpu.dimension_semantics<arbitrary>], iteration_bounds = array<i64: 2, 1>, scalar_prefetch = 0 : i64, scratch_operands = 1 : i64, tpu.core_type = #tpu.core_type<tc>, window_params = [{transform_indices = @transform_0, window_bounds = array<i64: 64, 128>}, {pipeline_mode = #tpu.pipeline_mode<synchronous>, transform_indices = @transform_1, window_bounds = array<i64: 128, 256>}, {pipeline_mode = #tpu.pipeline_mode<synchronous>, transform_indices = @transform_2, window_bounds = array<i64: 1, 256>}, {pipeline_mode = #tpu.pipeline_mode<synchronous>, transform_indices = @transform_3, window_bounds = array<i64: 256, 128>}, {pipeline_mode = #tpu.pipeline_mode<synchronous>, transform_indices = @transform_4, window_bounds = array<i64: 1, 128>}, {transform_indices = @transform_5, window_bounds = array<i64: 64, 128>}]} {
    %c0_i32 = arith.constant 0 : i32
    %0 = arith.cmpi eq, %arg1, %c0_i32 : i32
    %1 = arith.extui %0 : i1 to i32
    %c0_i32_0 = arith.constant 0 : i32
    %2 = arith.cmpi ne, %1, %c0_i32_0 : i32
    scf.if %2 {
      %cst_19 = arith.constant 0.000000e+00 : f32
      %31 = vector.broadcast %cst_19 : f32 to vector<64x128xf32>
      %c0_20 = arith.constant 0 : index
      %c0_21 = arith.constant 0 : index
      %32 = vector.load %arg8[%c0_20, %c0_21] : memref<64x128xf32, #tpu.memory_space<vmem>>, vector<64x128xf32>
      tpu.vector_store %arg8[%c0_20, %c0_21], %31 {strides = array<i32>} : memref<64x128xf32, #tpu.memory_space<vmem>>, vector<64x128xf32>,
    } else {
    }
    %c0 = arith.constant 0 : index
    %c0_1 = arith.constant 0 : index
    %3 = vector.load %arg2[%c0, %c0_1] : memref<64x128xbf16, #tpu.memory_space<vmem>>, vector<64x128xbf16>
    %c0_2 = arith.constant 0 : index
    %c0_3 = arith.constant 0 : index
    %4 = vector.load %arg3[%c0_2, %c0_3] : memref<128x256xbf16, #tpu.memory_space<vmem>>, vector<128x256xbf16>
    %cst = arith.constant dense<0.000000e+00> : vector<64x256xf32>
    %5 = tpu.matmul %3, %4, %cst {dimension_numbers = #tpu.dot_dimension_numbers<[1], [0], [0], [1], [0, 0, 1, 1], [], []>} : vector<64x128xbf16>, vector<128x256xbf16>, vector<64x256xf32> -> vector<64x256xf32>
    %c0_4 = arith.constant 0 : index
    %c0_5 = arith.constant 0 : index
    %6 = vector.load %arg4[%c0_4, %c0_5] : memref<1x256xf32, #tpu.memory_space<vmem>>, vector<1x256xf32>
    %7 = vector.broadcast %6 : vector<1x256xf32> to vector<64x256xf32>
    %8 = arith.addf %5, %7 : vector<64x256xf32>
    %9 = arith.mulf %8, %8 : vector<64x256xf32>
    %10 = arith.mulf %8, %9 : vector<64x256xf32>
    %cst_6 = arith.constant 4.471500e-02 : f32
    %11 = vector.broadcast %cst_6 : f32 to vector<64x256xf32>
    %12 = arith.mulf %11, %10 : vector<64x256xf32>
    %13 = arith.addf %8, %12 : vector<64x256xf32>
    %cst_7 = arith.constant 0.797884583 : f32
    %14 = vector.broadcast %cst_7 : f32 to vector<64x256xf32>
    %15 = arith.mulf %14, %13 : vector<64x256xf32>
    %16 = math.tanh %15 : vector<64x256xf32>
    %cst_8 = arith.constant 1.000000e+00 : f32
    %17 = vector.broadcast %cst_8 : f32 to vector<64x256xf32>
    %18 = arith.addf %17, %16 : vector<64x256xf32>
    %cst_9 = arith.constant 5.000000e-01 : f32
    %19 = vector.broadcast %cst_9 : f32 to vector<64x256xf32>
    %20 = arith.mulf %19, %18 : vector<64x256xf32>
    %21 = arith.mulf %8, %20 : vector<64x256xf32>
    %22 = arith.truncf %21 : vector<64x256xf32> to vector<64x256xbf16>
    %c0_10 = arith.constant 0 : index
    %c0_11 = arith.constant 0 : index
    %23 = vector.load %arg8[%c0_10, %c0_11] : memref<64x128xf32, #tpu.memory_space<vmem>>, vector<64x128xf32>
    %c0_12 = arith.constant 0 : index
    %c0_13 = arith.constant 0 : index
    %24 = vector.load %arg5[%c0_12, %c0_13] : memref<256x128xbf16, #tpu.memory_space<vmem>>, vector<256x128xbf16>
    %cst_14 = arith.constant dense<0.000000e+00> : vector<64x128xf32>
    %25 = tpu.matmul %22, %24, %cst_14 {dimension_numbers = #tpu.dot_dimension_numbers<[1], [0], [0], [1], [0, 0, 1, 1], [], []>} : vector<64x256xbf16>, vector<256x128xbf16>, vector<64x128xf32> -> vector<64x128xf32>
    %26 = arith.addf %23, %25 : vector<64x128xf32>
    %c0_15 = arith.constant 0 : index
    %c0_16 = arith.constant 0 : index
    %27 = vector.load %arg8[%c0_15, %c0_16] : memref<64x128xf32, #tpu.memory_space<vmem>>, vector<64x128xf32>
    tpu.vector_store %arg8[%c0_15, %c0_16], %26 {strides = array<i32>} : memref<64x128xf32, #tpu.memory_space<vmem>>, vector<64x128xf32>,
    %c0_i32_17 = arith.constant 0 : i32
    %28 = arith.cmpi eq, %arg1, %c0_i32_17 : i32
    %29 = arith.extui %28 : i1 to i32
    %c0_i32_18 = arith.constant 0 : i32
    %30 = arith.cmpi ne, %29, %c0_i32_18 : i32
    scf.if %30 {
      %c0_19 = arith.constant 0 : index
      %c0_20 = arith.constant 0 : index
      %31 = vector.load %arg8[%c0_19, %c0_20] : memref<64x128xf32, #tpu.memory_space<vmem>>, vector<64x128xf32>
      %c0_21 = arith.constant 0 : index
      %c0_22 = arith.constant 0 : index
      %32 = vector.load %arg6[%c0_21, %c0_22] : memref<1x128xf32, #tpu.memory_space<vmem>>, vector<1x128xf32>
      %33 = vector.broadcast %32 : vector<1x128xf32> to vector<64x128xf32>
      %34 = arith.addf %31, %33 : vector<64x128xf32>
      %35 = arith.truncf %34 : vector<64x128xf32> to vector<64x128xbf16>
      %c0_23 = arith.constant 0 : index
      %c0_24 = arith.constant 0 : index
      %36 = vector.load %arg7[%c0_23, %c0_24] : memref<64x128xbf16, #tpu.memory_space<vmem>>, vector<64x128xbf16>
      tpu.vector_store %arg7[%c0_23, %c0_24], %35 {strides = array<i32>} : memref<64x128xbf16, #tpu.memory_space<vmem>>, vector<64x128xbf16>,
    } else {
    }
    return
  }
  func.func @transform_0(%arg0: i32, %arg1: i32) -> (i32, i32) {
    %c0_i32 = arith.constant 0 : i32
    %c0_i32_0 = arith.constant 0 : i32
    return %arg0, %c0_i32 : i32, i32
  }
  func.func @transform_1(%arg0: i32, %arg1: i32) -> (i32, i32) {
    %c0_i32 = arith.constant 0 : i32
    %c0_i32_0 = arith.constant 0 : i32
    return %c0_i32, %arg1 : i32, i32
  }
  func.func @transform_2(%arg0: i32, %arg1: i32) -> (i32, i32) {
    %c0_i32 = arith.constant 0 : i32
    %c0_i32_0 = arith.constant 0 : i32
    return %c0_i32, %arg1 : i32, i32
  }
  func.func @transform_3(%arg0: i32, %arg1: i32) -> (i32, i32) {
    %c0_i32 = arith.constant 0 : i32
    %c0_i32_0 = arith.constant 0 : i32
    return %arg1, %c0_i32 : i32, i32
  }
  func.func @transform_4(%arg0: i32, %arg1: i32) -> (i32, i32) {
    %c0_i32 = arith.constant 0 : i32
    %c0_i32_0 = arith.constant 0 : i32
    %c0_i32_1 = arith.constant 0 : i32
    return %c0_i32, %c0_i32_0 : i32, i32
  }
  func.func @transform_5(%arg0: i32, %arg1: i32) -> (i32, i32) {
    %c0_i32 = arith.constant 0 : i32
    %c0_i32_0 = arith.constant 0 : i32
    return %arg0, %c0_i32 : i32, i32
  }
}

module attributes {stable_mosaic.version = 11 : i64} {
  func.func @_ffn_kernel(%arg0: i32, %arg1: i32, %arg2: memref<64x128xbf16, #tpu.memory_space<vmem>>, %arg3: memref<128x256xbf16, #tpu.memory_space<vmem>>, %arg4: memref<1x256xf32, #tpu.memory_space<vmem>>, %arg5: memref<256x128xbf16, #tpu.memory_space<vmem>>, %arg6: memref<1x128xf32, #tpu.memory_space<vmem>>, %arg7: memref<64x128xbf16, #tpu.memory_space<vmem>>, %arg8: memref<64x128xf32, #tpu.memory_space<vmem>>) attributes {dimension_semantics = [#tpu.dimension_semantics<parallel>, #tpu.dimension_semantics<arbitrary>], iteration_bounds = array<i64: 2, 1>, scalar_prefetch = 0 : i64, scratch_operands = 1 : i64, tpu.core_type = #tpu.core_type<tc>, window_params = [{transform_indices = @transform_0, window_bounds = array<i64: 64, 128>}, {transform_indices = @transform_1, window_bounds = array<i64: 128, 256>}, {transform_indices = @transform_2, window_bounds = array<i64: 1, 256>}, {transform_indices = @transform_3, window_bounds = array<i64: 256, 128>}, {pipeline_mode = #tpu.pipeline_mode<synchronous>, transform_indices = @transform_4, window_bounds = array<i64: 1, 128>}, {transform_indices = @transform_5, window_bounds = array<i64: 64, 128>}]} {
    %c0_i32 = arith.constant 0 : i32
    %0 = arith.cmpi eq, %arg1, %c0_i32 : i32
    %1 = arith.extui %0 : i1 to i32
    %c0_i32_0 = arith.constant 0 : i32
    %2 = arith.cmpi ne, %1, %c0_i32_0 : i32
    scf.if %2 {
      %cst_19 = arith.constant 0.000000e+00 : f32
      %31 = vector.broadcast %cst_19 : f32 to vector<64x128xf32>
      %c0_20 = arith.constant 0 : index
      %c0_21 = arith.constant 0 : index
      %32 = vector.load %arg8[%c0_20, %c0_21] : memref<64x128xf32, #tpu.memory_space<vmem>>, vector<64x128xf32>
      tpu.vector_store %arg8[%c0_20, %c0_21], %31 {strides = array<i32>} : memref<64x128xf32, #tpu.memory_space<vmem>>, vector<64x128xf32>,
    } else {
    }
    %c0 = arith.constant 0 : index
    %c0_1 = arith.constant 0 : index
    %3 = vector.load %arg2[%c0, %c0_1] : memref<64x128xbf16, #tpu.memory_space<vmem>>, vector<64x128xbf16>
    %c0_2 = arith.constant 0 : index
    %c0_3 = arith.constant 0 : index
    %4 = vector.load %arg3[%c0_2, %c0_3] : memref<128x256xbf16, #tpu.memory_space<vmem>>, vector<128x256xbf16>
    %cst = arith.constant dense<0.000000e+00> : vector<64x256xf32>
    %5 = tpu.matmul %3, %4, %cst {dimension_numbers = #tpu.dot_dimension_numbers<[1], [0], [0], [1], [0, 0, 1, 1], [], []>} : vector<64x128xbf16>, vector<128x256xbf16>, vector<64x256xf32> -> vector<64x256xf32>
    %c0_4 = arith.constant 0 : index
    %c0_5 = arith.constant 0 : index
    %6 = vector.load %arg4[%c0_4, %c0_5] : memref<1x256xf32, #tpu.memory_space<vmem>>, vector<1x256xf32>
    %7 = vector.broadcast %6 : vector<1x256xf32> to vector<64x256xf32>
    %8 = arith.addf %5, %7 : vector<64x256xf32>
    %9 = arith.mulf %8, %8 : vector<64x256xf32>
    %10 = arith.mulf %8, %9 : vector<64x256xf32>
    %cst_6 = arith.constant 4.471500e-02 : f32
    %11 = vector.broadcast %cst_6 : f32 to vector<64x256xf32>
    %12 = arith.mulf %11, %10 : vector<64x256xf32>
    %13 = arith.addf %8, %12 : vector<64x256xf32>
    %cst_7 = arith.constant 0.797884583 : f32
    %14 = vector.broadcast %cst_7 : f32 to vector<64x256xf32>
    %15 = arith.mulf %14, %13 : vector<64x256xf32>
    %16 = math.tanh %15 : vector<64x256xf32>
    %cst_8 = arith.constant 1.000000e+00 : f32
    %17 = vector.broadcast %cst_8 : f32 to vector<64x256xf32>
    %18 = arith.addf %17, %16 : vector<64x256xf32>
    %cst_9 = arith.constant 5.000000e-01 : f32
    %19 = vector.broadcast %cst_9 : f32 to vector<64x256xf32>
    %20 = arith.mulf %19, %18 : vector<64x256xf32>
    %21 = arith.mulf %8, %20 : vector<64x256xf32>
    %22 = arith.truncf %21 : vector<64x256xf32> to vector<64x256xbf16>
    %c0_10 = arith.constant 0 : index
    %c0_11 = arith.constant 0 : index
    %23 = vector.load %arg8[%c0_10, %c0_11] : memref<64x128xf32, #tpu.memory_space<vmem>>, vector<64x128xf32>
    %c0_12 = arith.constant 0 : index
    %c0_13 = arith.constant 0 : index
    %24 = vector.load %arg5[%c0_12, %c0_13] : memref<256x128xbf16, #tpu.memory_space<vmem>>, vector<256x128xbf16>
    %cst_14 = arith.constant dense<0.000000e+00> : vector<64x128xf32>
    %25 = tpu.matmul %22, %24, %cst_14 {dimension_numbers = #tpu.dot_dimension_numbers<[1], [0], [0], [1], [0, 0, 1, 1], [], []>} : vector<64x256xbf16>, vector<256x128xbf16>, vector<64x128xf32> -> vector<64x128xf32>
    %26 = arith.addf %23, %25 : vector<64x128xf32>
    %c0_15 = arith.constant 0 : index
    %c0_16 = arith.constant 0 : index
    %27 = vector.load %arg8[%c0_15, %c0_16] : memref<64x128xf32, #tpu.memory_space<vmem>>, vector<64x128xf32>
    tpu.vector_store %arg8[%c0_15, %c0_16], %26 {strides = array<i32>} : memref<64x128xf32, #tpu.memory_space<vmem>>, vector<64x128xf32>,
    %c0_i32_17 = arith.constant 0 : i32
    %28 = arith.cmpi eq, %arg1, %c0_i32_17 : i32
    %29 = arith.extui %28 : i1 to i32
    %c0_i32_18 = arith.constant 0 : i32
    %30 = arith.cmpi ne, %29, %c0_i32_18 : i32
    scf.if %30 {
      %c0_19 = arith.constant 0 : index
      %c0_20 = arith.constant 0 : index
      %31 = vector.load %arg8[%c0_19, %c0_20] : memref<64x128xf32, #tpu.memory_space<vmem>>, vector<64x128xf32>
      %c0_21 = arith.constant 0 : index
      %c0_22 = arith.constant 0 : index
      %32 = vector.load %arg6[%c0_21, %c0_22] : memref<1x128xf32, #tpu.memory_space<vmem>>, vector<1x128xf32>
      %33 = vector.broadcast %32 : vector<1x128xf32> to vector<64x128xf32>
      %34 = arith.addf %31, %33 : vector<64x128xf32>
      %35 = arith.truncf %34 : vector<64x128xf32> to vector<64x128xbf16>
      %c0_23 = arith.constant 0 : index
      %c0_24 = arith.constant 0 : index
      %36 = vector.load %arg7[%c0_23, %c0_24] : memref<64x128xbf16, #tpu.memory_space<vmem>>, vector<64x128xbf16>
      tpu.vector_store %arg7[%c0_23, %c0_24], %35 {strides = array<i32>} : memref<64x128xbf16, #tpu.memory_space<vmem>>, vector<64x128xbf16>,
    } else {
    }
    return
  }
  func.func @transform_0(%arg0: i32, %arg1: i32) -> (i32, i32) {
    %c0_i32 = arith.constant 0 : i32
    %c0_i32_0 = arith.constant 0 : i32
    return %arg0, %c0_i32 : i32, i32
  }
  func.func @transform_1(%arg0: i32, %arg1: i32) -> (i32, i32) {
    %c0_i32 = arith.constant 0 : i32
    %c0_i32_0 = arith.constant 0 : i32
    return %c0_i32, %arg1 : i32, i32
  }
  func.func @transform_2(%arg0: i32, %arg1: i32) -> (i32, i32) {
    %c0_i32 = arith.constant 0 : i32
    %c0_i32_0 = arith.constant 0 : i32
    return %c0_i32, %arg1 : i32, i32
  }
  func.func @transform_3(%arg0: i32, %arg1: i32) -> (i32, i32) {
    %c0_i32 = arith.constant 0 : i32
    %c0_i32_0 = arith.constant 0 : i32
    return %arg1, %c0_i32 : i32, i32
  }
  func.func @transform_4(%arg0: i32, %arg1: i32) -> (i32, i32) {
    %c0_i32 = arith.constant 0 : i32
    %c0_i32_0 = arith.constant 0 : i32
    %c0_i32_1 = arith.constant 0 : i32
    return %c0_i32, %c0_i32_0 : i32, i32
  }
  func.func @transform_5(%arg0: i32, %arg1: i32) -> (i32, i32) {
    %c0_i32 = arith.constant 0 : i32
    %c0_i32_0 = arith.constant 0 : i32
    return %arg0, %c0_i32 : i32, i32
  }
}

</mosaic_0001>

<llo_original>
// kernel: tpu_custom_call.1
$region0: #{tpu_custom_call.1}
  #allocation0 [shape = 'u32[]', space=smem, size = 0x4, offset = 0x4, fixed_abs, tag = 'smem constant byte address 0x4 - core index']
  #allocation1 [shape = 'u32[144,128]{1,0:T(1,128)}', space=vmem, size = 0x12000, scoped, tag = 'internal scratch']
  #allocation2 [shape = 'f32[64,128]{1,0:T(8,128)}', space=vmem, size = 0x8000, scoped, tag = 'scratch operand']
  %s0 = inlined_call_operand.hbm [shape: bf16[100,128], index: 0, kind: input, shape index: {}]
  %s1 = inlined_call_operand.hbm [shape: bf16[128,256], index: 1, kind: input, shape index: {}]
  %s2 = inlined_call_operand.vmem [shape: f32[1,256], index: 2, kind: input, shape index: {}]
  %s3 = inlined_call_operand.hbm [shape: bf16[256,128], index: 3, kind: input, shape index: {}]
  %s4 = inlined_call_operand.vmem [shape: f32[1,128], index: 4, kind: input, shape index: {}]
  %s5 = inlined_call_operand.hbm [shape: bf16[100,128], index: 5, kind: output, shape index: {}]
  %s6 = sld [smem:[#allocation0]]
  $region73: #{tpu_custom_call.1} parent=0
    _
  %s8 = ssub.s32 1, %s6
  %s9 = scalar_select 0, %s8, %s6
  $region1: #{tpu_custom_call.1} parent=0
    #allocation3 [shape = 'u8[32768]{0}', space=vmem, size = 0x8000, scoped, tag = 'input window, operand 0']
    #allocation4 [shape = 's32[2]{0}', space=sflag, size = 0x8, scoped, tag = 'scoped memory for tpu_custom_call.1']
    #allocation5 [shape = 's32[2]{0}', space=sflag, size = 0x8, scoped, tag = 'scoped memory for tpu_custom_call.1']
    #allocation6 [shape = 'u8[65536]{0}', space=vmem, size = 0x10000, scoped, tag = 'input window, operand 1, single buffered']
    #allocation7 [shape = 's32[1]{0}', space=sflag, size = 0x4, scoped, tag = 'scoped memory for tpu_custom_call.1']
    #allocation8 [shape = 'u8[65536]{0}', space=vmem, size = 0x10000, scoped, tag = 'input window, operand 3, single buffered']
    #allocation9 [shape = 'u8[32768]{0}', space=vmem, size = 0x8000, scoped, tag = 'output window, operand 0']
    %10 = vsyncpa [#allocation4], 0
    %s11 = scalar_lea.sflag [#allocation4], 1
    %12 = vsyncpa %s11, 0
    %13 = vsyncpa [#allocation7], 0
    %14 = vsyncpa [#allocation5], 0
    %s15 = scalar_lea.sflag [#allocation5], 1
    %16 = vsyncpa %s15, 0
    loop: start=0, step=1, limit=4
    $region2: #{tpu_custom_call.1} parent=1 // loop_pre_header
      _
    $region3: #{tpu_custom_call.1} parent=1 // loop_header
      %s18 = sphi 0, %s22
      %p19 = scmp.ge.s32.totalorder %s18, 4
      %s25 = sphi 0, %s37
      %s26 = sphi 0, %s33
      %s27 = sphi 0, %s25
      %s28 = sphi 0, %s26
      %s29 = sphi 0, %s27
      %s30 = sphi 0, %s28
      %s40 = sphi 0, %s42
      %s43 = sphi 0, %s40
      %s44 = sphi 0, %s43
      %s60 = sphi 0, %s44
      %s66 = sphi 0, %s68
      %s69 = sphi 0, %s66
      %s70 = sphi 0, %s69
      %s86 = sphi 0, %s70
      %s92 = sphi 0, %s94
      %s95 = sphi 0, %s92
      %s96 = sphi 0, %s95
      %s112 = sphi 0, %s96
      %s118 = sphi 0, %s120
      %s121 = sphi 0, %s118
      %s122 = sphi 0, %s121
      %s138 = sphi 0, %s122
      %s142 = sphi 0, %s142
      %s144 = sphi 0, %s142
      %s145 = sphi 0, %s144
      %s159 = sphi 0, %s145
      %s165 = sphi 0, %s167
      %s168 = sphi 0, %s165
      %s169 = sphi 0, %s168
      %s185 = sphi 0, %s169
    $region4: #{tpu_custom_call.1} parent=1 // loop_header_branch
      %21 = sbr.rel (%p19) target = $region8
    $region5: #{tpu_custom_call.1} parent=1 // loop_body
      %s23 = ssub.s32 %s18, 1
      %s24 = ssub.s32 %s18, 2
      %s31 = sadd.s32 1, %s26
      %p32 = scmp.ge.s32.totalorder %s31, 1
      %s33 = scalar_select %p32, 0, %s31
      %s34 = sadd.s32 1, %s25
      %s35 = scalar_select %p32, %s34, %s25
      %p36 = scmp.ge.s32.totalorder %s35, 2
      %s37 = scalar_select %p36, 0, %s35
      %s38 = ssub.s32 %s25, %s37
      %p39 = scmp.eq.s32.totalorder %s38, 0
      %s41 = sadd.s32 %s40, 1
      %s42 = scalar_select %p39, %s40, %s41
      %p45 = pneg %p39
      %p46 = scmp.eq.s32.totalorder %s18, 1
      %p47 = por %p45, %p46
      %p48 = scmp.ne.s32.totalorder %s40, %s43
      %p49 = scmp.eq.s32.totalorder %s18, 0
      %p50 = por %p48, %p49
      %p51 = scmp.ne.s32.totalorder %s40, %s43
      %p52 = scmp.eq.s32.totalorder %s23, 1
      %p53 = por %p51, %p52
      %p54 = scmp.ne.s32.totalorder %s43, %s44
      %p55 = scmp.eq.s32.totalorder %s23, 0
      %p56 = por %p54, %p55
      %p57 = scmp.ne.s32.totalorder %s43, %s44
      %p58 = scmp.eq.s32.totalorder %s24, 1
      %p59 = por %p57, %p58
      %p61 = scmp.ne.s32.totalorder %s44, %s60
      %p62 = scmp.eq.s32.totalorder %s24, 0
      %p63 = por %p61, %p62
      %s64 = ssub.s32 %s26, %s33
      %p65 = scmp.eq.s32.totalorder %s64, 0
      %s67 = sadd.s32 %s66, 1
      %s68 = scalar_select %p65, %s66, %s67
      %p71 = pneg %p65
      %p72 = scmp.eq.s32.totalorder %s18, 1
      %p73 = por %p71, %p72
      %p74 = scmp.ne.s32.totalorder %s66, %s69
      %p75 = scmp.eq.s32.totalorder %s18, 0
      %p76 = por %p74, %p75
      %p77 = scmp.ne.s32.totalorder %s66, %s69
      %p78 = scmp.eq.s32.totalorder %s23, 1
      %p79 = por %p77, %p78
      %p80 = scmp.ne.s32.totalorder %s69, %s70
      %p81 = scmp.eq.s32.totalorder %s23, 0
      %p82 = por %p80, %p81
      %p83 = scmp.ne.s32.totalorder %s69, %s70
      %p84 = scmp.eq.s32.totalorder %s24, 1
      %p85 = por %p83, %p84
      %p87 = scmp.ne.s32.totalorder %s70, %s86
      %p88 = scmp.eq.s32.totalorder %s24, 0
      %p89 = por %p87, %p88
      %s90 = ssub.s32 %s26, %s33
      %p91 = scmp.eq.s32.totalorder %s90, 0
      %s93 = sadd.s32 %s92, 1
      %s94 = scalar_select %p91, %s92, %s93
      %p97 = pneg %p91
      %p98 = scmp.eq.s32.totalorder %s18, 1
      %p99 = por %p97, %p98
      %p100 = scmp.ne.s32.totalorder %s92, %s95
      %p101 = scmp.eq.s32.totalorder %s18, 0
      %p102 = por %p100, %p101
      %p103 = scmp.ne.s32.totalorder %s92, %s95
      %p104 = scmp.eq.s32.totalorder %s23, 1
      %p105 = por %p103, %p104
      %p106 = scmp.ne.s32.totalorder %s95, %s96
      %p107 = scmp.eq.s32.totalorder %s23, 0
      %p108 = por %p106, %p107
      %p109 = scmp.ne.s32.totalorder %s95, %s96
      %p110 = scmp.eq.s32.totalorder %s24, 1
      %p111 = por %p109, %p110
      %p113 = scmp.ne.s32.totalorder %s96, %s112
      %p114 = scmp.eq.s32.totalorder %s24, 0
      %p115 = por %p113, %p114
      %s116 = ssub.s32 %s26, %s33
      %p117 = scmp.eq.s32.totalorder %s116, 0
      %s119 = sadd.s32 %s118, 1
      %s120 = scalar_select %p117, %s118, %s119
      %p123 = pneg %p117
      %p124 = scmp.eq.s32.totalorder %s18, 1
      %p125 = por %p123, %p124
      %p126 = scmp.ne.s32.totalorder %s118, %s121
      %p127 = scmp.eq.s32.totalorder %s18, 0
      %p128 = por %p126, %p127
      %p129 = scmp.ne.s32.totalorder %s118, %s121
      %p130 = scmp.eq.s32.totalorder %s23, 1
      %p131 = por %p129, %p130
      %p132 = scmp.ne.s32.totalorder %s121, %s122
      %p133 = scmp.eq.s32.totalorder %s23, 0
      %p134 = por %p132, %p133
      %p135 = scmp.ne.s32.totalorder %s121, %s122
      %p136 = scmp.eq.s32.totalorder %s24, 1
      %p137 = por %p135, %p136
      %p139 = scmp.ne.s32.totalorder %s122, %s138
      %p140 = scmp.eq.s32.totalorder %s24, 0
      %p141 = por %p139, %p140
      %s143 = sadd.s32 %s142, 1
      %p146 = scmp.eq.s32.totalorder %s18, 1
      %p147 = scmp.ne.s32.totalorder %s142, %s144
      %p148 = scmp.eq.s32.totalorder %s18, 0
      %p149 = por %p147, %p148
      %p150 = scmp.ne.s32.totalorder %s142, %s144
      %p151 = scmp.eq.s32.totalorder %s23, 1
      %p152 = por %p150, %p151
      %p153 = scmp.ne.s32.totalorder %s144, %s145
      %p154 = scmp.eq.s32.totalorder %s23, 0
      %p155 = por %p153, %p154
      %p156 = scmp.ne.s32.totalorder %s144, %s145
      %p157 = scmp.eq.s32.totalorder %s24, 1
      %p158 = por %p156, %p157
      %p160 = scmp.ne.s32.totalorder %s145, %s159
      %p161 = scmp.eq.s32.totalorder %s24, 0
      %p162 = por %p160, %p161
      %s163 = ssub.s32 %s25, %s37
      %p164 = scmp.eq.s32.totalorder %s163, 0
      %s166 = sadd.s32 %s165, 1
      %s167 = scalar_select %p164, %s165, %s166
      %p170 = pneg %p164
      %p171 = scmp.eq.s32.totalorder %s18, 1
      %p172 = por %p170, %p171
      %p173 = scmp.ne.s32.totalorder %s165, %s168
      %p174 = scmp.eq.s32.totalorder %s18, 0
      %p175 = por %p173, %p174
      %p176 = scmp.ne.s32.totalorder %s165, %s168
      %p177 = scmp.eq.s32.totalorder %s23, 1
      %p178 = por %p176, %p177
      %p179 = scmp.ne.s32.totalorder %s168, %s169
      %p180 = scmp.eq.s32.totalorder %s23, 0
      %p181 = por %p179, %p180
      %p182 = scmp.ne.s32.totalorder %s168, %s169
      %p183 = scmp.eq.s32.totalorder %s24, 1
      %p184 = por %p182, %p183
      %p186 = scmp.ne.s32.totalorder %s169, %s185
      %p187 = scmp.eq.s32.totalorder %s24, 0
      %p188 = por %p186, %p187
      %p189 = scmp.le.s32.totalorder 1, %s18
      %p190 = scmp.lt.s32.totalorder %s18, 3
      %p191 = pnand %p189, %p190
      %p192 = pneg %p191
      // Predicated region
      $region9: #{tpu_custom_call.1} parent=5 // pred_check
        _
      $region10: #{tpu_custom_call.1} parent=5 // pred_check_branch
        %194 = sbr.rel (%p191) target = $region12
      $region11: #{tpu_custom_call.1} parent=5 // pred_region
        %s195 = ssub.s32 %s18, 1
        // Predicated region
        $region13: #{tpu_custom_call.1} parent=11 // pred_check
          %p196 = pneg %p82
        $region14: #{tpu_custom_call.1} parent=11 // pred_check_branch
          %198 = sbr.rel (%p196) target = $region16
        $region15: #{tpu_custom_call.1} parent=11 // pred_region
          %s199 = smul.u32 2, %s28
          %s201 = ssub.s32 2048, 2048
          %202 = vsyncadd [#allocation7], %s201
          %s203 = smul.addr %s199, 64
          %s204 = scalar_lea.hbm %s1, %s203
          %s205 = sshll.u32 [#allocation6], 4
          %s206 = int_to_ptr.vmem [resolvable:$true] %s205
          %211 = dma.hbm_to_vmem [thread:$0]  %s204, 2048, %s206, [#allocation7], 128, 128, 8
        $region16: #{tpu_custom_call.1} parent=11 // pred_fallthru
          _
        // Predicated region
        $region17: #{tpu_custom_call.1} parent=11 // pred_check
          %p212 = pneg %p108
        $region18: #{tpu_custom_call.1} parent=11 // pred_check_branch
          %214 = sbr.rel (%p212) target = $region20
        $region19: #{tpu_custom_call.1} parent=11 // pred_region
          %s215 = smul.u32 2, %s28
          %p216 = scmp.lt.s32.totalorder %s215, 1
          %s217 = scalar_select %p216, %s215, 1
          %s218 = scalar_lea.vmem %s2, %s217
          %s219 = smul.u32 2, %s28
        $region20: #{tpu_custom_call.1} parent=11 // pred_fallthru
          _
        // Predicated region
        $region21: #{tpu_custom_call.1} parent=11 // pred_check
          %p220 = pneg %p134
        $region22: #{tpu_custom_call.1} parent=11 // pred_check_branch
          %222 = sbr.rel (%p220) target = $region24
        $region23: #{tpu_custom_call.1} parent=11 // pred_region
          %s223 = smul.u32 32, %s28
          %s225 = ssub.s32 2048, 2048
          %226 = vsyncadd [#allocation7], %s225
          %s227 = smul.addr %s223, 64
          %s228 = scalar_lea.hbm %s3, %s227
          %s229 = sshll.u32 [#allocation8], 4
          %s230 = int_to_ptr.vmem [resolvable:$true] %s229
          %235 = dma.hbm_to_vmem [thread:$0]  %s228, 2048, %s230, [#allocation7], 64, 64, 4
        $region24: #{tpu_custom_call.1} parent=11 // pred_fallthru
          _
        // Predicated region
        $region25: #{tpu_custom_call.1} parent=11 // pred_check
          %p236 = pneg %p155
        $region26: #{tpu_custom_call.1} parent=11 // pred_check_branch
          %238 = sbr.rel (%p236) target = $region28
        $region27: #{tpu_custom_call.1} parent=11 // pred_region
          _
        $region28: #{tpu_custom_call.1} parent=11 // pred_fallthru
          _
      $region12: #{tpu_custom_call.1} parent=5 // pred_fallthru
        _
      %p239 = scmp.lt.s32.totalorder %s18, 2
      // Predicated region
      $region29: #{tpu_custom_call.1} parent=5 // pred_check
        %p240 = pneg %p239
      $region30: #{tpu_custom_call.1} parent=5 // pred_check_branch
        %242 = sbr.rel (%p240) target = $region32
      $region31: #{tpu_custom_call.1} parent=5 // pred_region
        // Predicated region
        $region33: #{tpu_custom_call.1} parent=31 // pred_check
          %p243 = pneg %p50
        $region34: #{tpu_custom_call.1} parent=31 // pred_check_branch
          %245 = sbr.rel (%p243) target = $region36
        $region35: #{tpu_custom_call.1} parent=31 // pred_region
          %s246 = sand.u32 %s40, 1
          %s247 = scalar_lea.sflag [#allocation4], %s246
          %s248 = sand.u32 %s40, 1
          %s249 = smul.addr %s248, 32
          %s250 = scalar_lea.vmem [#allocation3], %s249
          %s251 = smul.u32 8, %s25
          %s252 = ssub.s32 13, %s251
          %p253 = scmp.lt.s32.totalorder %s252, 8
          %s254 = scalar_select %p253, %s252, 8
          %s255 = smul.u32 64, %s254
          %s257 = ssub.s32 512, %s255
          %258 = vsyncadd %s247, %s257
          %p259 = scmp.ne.s32.totalorder 0, %s255
          %s260 = smul.addr %s251, 64
          %s261 = scalar_lea.hbm %s0, %s260
          %s262 = smul.u32 4, %s254
          %s263 = sshll.u32 %s250, 4
          %s264 = int_to_ptr.vmem [resolvable:$true] %s263
          %s265 = sshll.u32 %s262, 4
          %269 = dma.hbm_to_vmem [thread:$0]  (%p259), %s261, %s265, %s264, %s247, 64, 64, 4
        $region36: #{tpu_custom_call.1} parent=31 // pred_fallthru
          _
      $region32: #{tpu_custom_call.1} parent=5 // pred_fallthru
        _
      %p270 = scmp.le.s32.totalorder 1, %s18
      %p271 = scmp.lt.s32.totalorder %s18, 3
      %p272 = pnand %p270, %p271
      %p273 = pneg %p272
      // Predicated region
      $region37: #{tpu_custom_call.1} parent=5 // pred_check
        _
      $region38: #{tpu_custom_call.1} parent=5 // pred_check_branch
        %275 = sbr.rel (%p272) target = $region40
      $region39: #{tpu_custom_call.1} parent=5 // pred_region
        %s276 = ssub.s32 %s18, 1
        %s277 = sand.u32 %s43, 1
        %s278 = scalar_lea.sflag [#allocation4], %s277
        %s279 = sand.u32 %s43, 1
        %s280 = smul.addr %s279, 32
        %s281 = scalar_lea.vmem [#allocation3], %s280
        // Predicated region
        $region41: #{tpu_custom_call.1} parent=39 // pred_check
          %p282 = pneg %p56
        $region42: #{tpu_custom_call.1} parent=39 // pred_check_branch
          %284 = sbr.rel (%p282) target = $region44
        $region43: #{tpu_custom_call.1} parent=39 // pred_region
          %285 = dma.done %s278, 512
        $region44: #{tpu_custom_call.1} parent=39 // pred_fallthru
          _
        // Predicated region
        $region45: #{tpu_custom_call.1} parent=39 // pred_check
          %p286 = pneg %p82
        $region46: #{tpu_custom_call.1} parent=39 // pred_check_branch
          %288 = sbr.rel (%p286) target = $region48
        $region47: #{tpu_custom_call.1} parent=39 // pred_region
          %289 = dma.done [#allocation7], 2048
        $region48: #{tpu_custom_call.1} parent=39 // pred_fallthru
          _
        // Predicated region
        $region49: #{tpu_custom_call.1} parent=39 // pred_check
          %p290 = pneg %p134
        $region50: #{tpu_custom_call.1} parent=39 // pred_check_branch
          %292 = sbr.rel (%p290) target = $region52
        $region51: #{tpu_custom_call.1} parent=39 // pred_region
          %293 = dma.done [#allocation7], 2048
        $region52: #{tpu_custom_call.1} parent=39 // pred_fallthru
          _
        %s294 = sand.u32 %s43, 1
        %s295 = scalar_lea.sflag [#allocation4], %s294
        %s296 = sand.u32 %s43, 1
        %s297 = smul.addr %s296, 32
        %s298 = scalar_lea.vmem [#allocation3], %s297
        %p299 = pneg %p56
        %p300 = pneg %p53
        %p301 = pneg %p82
        %p302 = pneg %p79
        %s303 = smul.u32 2, %s28
        %p304 = scmp.lt.s32.totalorder %s303, 1
        %s305 = scalar_select %p304, %s303, 1
        %s306 = scalar_lea.vmem %s2, %s305
        %p307 = pneg %p108
        %p308 = pneg %p105
        %p309 = pneg %p134
        %p310 = pneg %p131
        %p311 = pneg %p155
        %p312 = pneg %p152
        %p313 = pneg %p181
        %p314 = pneg %p178
        %s315 = sand.u32 %s168, 1
        %s316 = scalar_lea.sflag [#allocation5], %s315
        %s317 = sand.u32 %s168, 1
        %s318 = smul.addr %s317, 32
        %s319 = scalar_lea.vmem [#allocation9], %s318
        %s320 = smul.u32 8, %s27
        %s321 = ssub.s32 13, %s320
        %p322 = scmp.lt.s32.totalorder %s321, 8
        %s323 = scalar_select %p322, %s321, 8
        %s324 = smul.u32 64, %s323
        %s325 = smul.u32 2, %s28
        %s326 = smul.u32 2, %s28
        %p327 = scmp.lt.s32.totalorder %s326, 1
        %s328 = scalar_select %p327, %s326, 1
        %s329 = scalar_lea.vmem %s2, %s328
        %s330 = smul.u32 2, %s28
        %s331 = smul.u32 32, %s28
        %s332 = smul.u32 8, %s27
        %s333 = ssub.s32 13, %s332
        %p334 = scmp.lt.s32.totalorder %s333, 8
        %s335 = scalar_select %p334, %s333, 8
        %s336 = smul.u32 64, %s335
        %p338 = scmp.eq.s32.totalorder %s28, 0
        // Predicated region
        $region53: #{tpu_custom_call.1} parent=39 // pred_check
          %p339 = pneg %p338
        $region54: #{tpu_custom_call.1} parent=39 // pred_check_branch
          %341 = sbr.rel (%p339) target = $region56
        $region55: #{tpu_custom_call.1} parent=39 // pred_region
          %342 = vst [vmem:[#allocation2] sm:$0xff] 0.0
          %343 = vst [vmem:[#allocation2 + $0x8] sm:$0xff] 0.0
          %344 = vst [vmem:[#allocation2 + $0x10] sm:$0xff] 0.0
          %345 = vst [vmem:[#allocation2 + $0x18] sm:$0xff] 0.0
          %346 = vst [vmem:[#allocation2 + $0x20] sm:$0xff] 0.0
          %347 = vst [vmem:[#allocation2 + $0x28] sm:$0xff] 0.0
          %348 = vst [vmem:[#allocation2 + $0x30] sm:$0xff] 0.0
          %349 = vst [vmem:[#allocation2 + $0x38] sm:$0xff] 0.0
        $region56: #{tpu_custom_call.1} parent=39 // pred_fallthru
          _
        %v350 = vld [vmem:[%s281] sm:$0xf]
        %v351 = vld [vmem:[%s281 + $0x4] sm:$0xf]
        %v352 = vld [vmem:[%s281 + $0x8] sm:$0xf]
        %v353 = vld [vmem:[%s281 + $0xc] sm:$0xf]
        %v354 = vld [vmem:[%s281 + $0x10] sm:$0xf]
        %v355 = vld [vmem:[%s281 + $0x14] sm:$0xf]
        %v356 = vld [vmem:[%s281 + $0x18] sm:$0xf]
        %v357 = vld [vmem:[%s281 + $0x1c] sm:$0xf]
        %v358 = vld [vmem:[#allocation6] sm:$0xff]
        %v359 = vld [vmem:[#allocation6 + $0x8] sm:$0xff]
        %v360 = vld [vmem:[#allocation6 + $0x10] sm:$0xff]
        %v361 = vld [vmem:[#allocation6 + $0x18] sm:$0xff]
        %v362 = vld [vmem:[#allocation6 + $0x20] sm:$0xff]
        %v363 = vld [vmem:[#allocation6 + $0x28] sm:$0xff]
        %v364 = vld [vmem:[#allocation6 + $0x30] sm:$0xff]
        %v365 = vld [vmem:[#allocation6 + $0x38] sm:$0xff]
        %v366 = vld [vmem:[#allocation6 + $0x40] sm:$0xff]
        %v367 = vld [vmem:[#allocation6 + $0x48] sm:$0xff]
        %v368 = vld [vmem:[#allocation6 + $0x50] sm:$0xff]
        %v369 = vld [vmem:[#allocation6 + $0x58] sm:$0xff]
        %v370 = vld [vmem:[#allocation6 + $0x60] sm:$0xff]
        %v371 = vld [vmem:[#allocation6 + $0x68] sm:$0xff]
        %v372 = vld [vmem:[#allocation6 + $0x70] sm:$0xff]
        %v373 = vld [vmem:[#allocation6 + $0x78] sm:$0xff]
        %v374 = vld [vmem:[%s329] sm:$0x3]
        %v376 = vlaneseq
        %v377 = vshrl.u32 %v376, 7
        %v378 = vsub.s32 0, %v377
        %v379 = vrot.slane %v374, %v378
        %v380 = vlaneseq
        %v381 = vshrl.u32 %v380, 7
        %v382 = vsub.s32 1, %v381
        %v383 = vrot.slane %v374, %v382
        %v394 = vunpack.c.l.b16 %v350
        %v395 = vunpack.c.l.b16 %v351
        %v396 = vunpack.c.l.b16 %v352
        %v397 = vunpack.c.l.b16 %v353
        %v398 = vunpack.c.l.b16 %v354
        %v399 = vunpack.c.l.b16 %v355
        %v400 = vunpack.c.l.b16 %v356
        %v401 = vunpack.c.l.b16 %v357
        %v402 = vpack.c.b16 %v395, %v394
        %v403 = vpack.c.b16 %v397, %v396
        %v404 = vpack.c.b16 %v399, %v398
        %v405 = vpack.c.b16 %v401, %v400
        %v426 = vunpack.c.l.b16 %v358
        %v427 = vunpack.c.h.b16 %v358
        %v428 = vunpack.c.l.b16 %v359
        %v429 = vunpack.c.h.b16 %v359
        %v430 = vunpack.c.l.b16 %v360
        %v431 = vunpack.c.h.b16 %v360
        %v432 = vunpack.c.l.b16 %v361
        %v433 = vunpack.c.h.b16 %v361
        %v434 = vunpack.c.l.b16 %v362
        %v435 = vunpack.c.h.b16 %v362
        %v436 = vunpack.c.l.b16 %v363
        %v437 = vunpack.c.h.b16 %v363
        %v438 = vunpack.c.l.b16 %v364
        %v439 = vunpack.c.h.b16 %v364
        %v440 = vunpack.c.l.b16 %v365
        %v441 = vunpack.c.h.b16 %v365
        %v442 = vunpack.c.l.b16 %v366
        %v443 = vunpack.c.h.b16 %v366
        %v444 = vunpack.c.l.b16 %v367
        %v445 = vunpack.c.h.b16 %v367
        %v446 = vunpack.c.l.b16 %v368
        %v447 = vunpack.c.h.b16 %v368
        %v448 = vunpack.c.l.b16 %v369
        %v449 = vunpack.c.h.b16 %v369
        %v450 = vunpack.c.l.b16 %v370
        %v451 = vunpack.c.h.b16 %v370
        %v452 = vunpack.c.l.b16 %v371
        %v453 = vunpack.c.h.b16 %v371
        %v454 = vunpack.c.l.b16 %v372
        %v455 = vunpack.c.h.b16 %v372
        %v456 = vunpack.c.l.b16 %v373
        %v457 = vunpack.c.h.b16 %v373
        %v458 = vpack.c.b16 %v428, %v426
        %v459 = vpack.c.b16 %v429, %v427
        %v460 = vpack.c.b16 %v432, %v430
        %v461 = vpack.c.b16 %v433, %v431
        %v462 = vpack.c.b16 %v436, %v434
        %v463 = vpack.c.b16 %v437, %v435
        %v464 = vpack.c.b16 %v440, %v438
        %v465 = vpack.c.b16 %v441, %v439
        %v466 = vpack.c.b16 %v444, %v442
        %v467 = vpack.c.b16 %v445, %v443
        %v468 = vpack.c.b16 %v448, %v446
        %v469 = vpack.c.b16 %v449, %v447
        %v470 = vpack.c.b16 %v452, %v450
        %v471 = vpack.c.b16 %v453, %v451
        %v472 = vpack.c.b16 %v456, %v454
        %v473 = vpack.c.b16 %v457, %v455
        %490 = vmatprep.subr.bf16.mxu0 %v459
        %491 = vmatpush1.bf16.msra.mxu0 %v458
        %492 = vmatprep.subr.bf16.mxu0 %v461
        %493 = vmatpush1.bf16.msra.mxu0 %v460
        %494 = vmatprep.subr.bf16.mxu0 %v463
        %495 = vmatpush1.bf16.msra.mxu0 %v462
        %496 = vmatprep.subr.bf16.mxu0 %v465
        %497 = vmatpush1.bf16.msra.mxu0 %v464
        %498 = vmatprep.subr.bf16.mxu0 %v467
        %499 = vmatpush1.bf16.msra.mxu0 %v466
        %500 = vmatprep.subr.bf16.mxu0 %v469
        %501 = vmatpush1.bf16.msra.mxu0 %v468
        %502 = vmatprep.subr.bf16.mxu0 %v471
        %503 = vmatpush1.bf16.msra.mxu0 %v470
        %504 = vmatprep.subr.bf16.mxu0 %v473
        %505 = vmatpush1.bf16.msra.mxu0 %v472
        %506 = vmatprep.subr.bf16.mxu0 0
        %507 = vmatpush1.bf16.msra.mxu0 0
        %508 = vmatprep.subr.bf16.mxu0 0
        %509 = vmatpush1.bf16.msra.mxu0 0
        %510 = vmatprep.subr.bf16.mxu0 0
        %511 = vmatpush1.bf16.msra.mxu0 0
        %512 = vmatprep.subr.bf16.mxu0 0
        %513 = vmatpush1.bf16.msra.mxu0 0
        %514 = vmatprep.subr.bf16.mxu0 0
        %515 = vmatpush1.bf16.msra.mxu0 0
        %516 = vmatprep.subr.bf16.mxu0 0
        %517 = vmatpush1.bf16.msra.mxu0 0
        %518 = vmatprep.subr.bf16.mxu0 0
        %519 = vmatpush1.bf16.msra.mxu0 0
        %520 = vmatprep.subr.bf16.mxu0 0
        %521 = vmatpush1.bf16.msra.mxu0 0
        %522 = vmatprep.mubr.bf16.mxu0 0
        %523 = vmatmul.mubr.bf16.gmra.mrb[0].mxu0 %v402
        %v524 = vpop.f32.mrb[0].mxu0
        %v525 = vadd.f32 %v379, %v524
        %v526 = vpop.f32.mrb[0].mxu0
        %v527 = vadd.f32 %v383, %v526
        %v528 = vpop.f32.mrb[0].mxu0
        %v529 = vadd.f32 %v379, %v528
        %v530 = vpop.f32.mrb[0].mxu0
        %v531 = vadd.f32 %v383, %v530
        %532 = vmatprep.mubr.bf16.mxu0 0
        %533 = vmatmul.mubr.bf16.gmra.mrb[0].mxu0 %v403
        %v534 = vpop.f32.mrb[0].mxu0
        %v535 = vadd.f32 %v379, %v534
        %v536 = vpop.f32.mrb[0].mxu0
        %v537 = vadd.f32 %v383, %v536
        %v538 = vpop.f32.mrb[0].mxu0
        %v539 = vadd.f32 %v379, %v538
        %v540 = vpop.f32.mrb[0].mxu0
        %v541 = vadd.f32 %v383, %v540
        %542 = vmatprep.mubr.bf16.mxu0 0
        %543 = vmatmul.mubr.bf16.gmra.mrb[0].mxu0 %v404
        %v544 = vpop.f32.mrb[0].mxu0
        %v545 = vadd.f32 %v379, %v544
        %v546 = vpop.f32.mrb[0].mxu0
        %v547 = vadd.f32 %v383, %v546
        %v548 = vpop.f32.mrb[0].mxu0
        %v549 = vadd.f32 %v379, %v548
        %v550 = vpop.f32.mrb[0].mxu0
        %v551 = vadd.f32 %v383, %v550
        %552 = vmatprep.mubr.bf16.mxu0 0
        %553 = vmatmul.mubr.bf16.gmra.mrb[0].mxu0 %v405
        %v554 = vpop.f32.mrb[0].mxu0
        %v555 = vadd.f32 %v379, %v554
        %v556 = vpop.f32.mrb[0].mxu0
        %v557 = vadd.f32 %v383, %v556
        %v558 = vpop.f32.mrb[0].mxu0
        %v559 = vadd.f32 %v379, %v558
        %v560 = vpop.f32.mrb[0].mxu0
        %v561 = vadd.f32 %v383, %v560
        %562 = vdwg.mxu0
        %v563 = vmul.f32 %v525, %v525
        %v564 = vmul.f32 %v527, %v527
        %v565 = vmul.f32 %v529, %v529
        %v566 = vmul.f32 %v531, %v531
        %v567 = vmul.f32 %v535, %v535
        %v568 = vmul.f32 %v537, %v537
        %v569 = vmul.f32 %v539, %v539
        %v570 = vmul.f32 %v541, %v541
        %v571 = vmul.f32 %v545, %v545
        %v572 = vmul.f32 %v547, %v547
        %v573 = vmul.f32 %v549, %v549
        %v574 = vmul.f32 %v551, %v551
        %v575 = vmul.f32 %v555, %v555
        %v576 = vmul.f32 %v557, %v557
        %v577 = vmul.f32 %v559, %v559
        %v578 = vmul.f32 %v561, %v561
        %v579 = vmul.f32 %v525, %v563
        %v580 = vmul.f32 %v527, %v564
        %v581 = vmul.f32 %v529, %v565
        %v582 = vmul.f32 %v531, %v566
        %v583 = vmul.f32 %v535, %v567
        %v584 = vmul.f32 %v537, %v568
        %v585 = vmul.f32 %v539, %v569
        %v586 = vmul.f32 %v541, %v570
        %v587 = vmul.f32 %v545, %v571
        %v588 = vmul.f32 %v547, %v572
        %v589 = vmul.f32 %v549, %v573
        %v590 = vmul.f32 %v551, %v574
        %v591 = vmul.f32 %v555, %v575
        %v592 = vmul.f32 %v557, %v576
        %v593 = vmul.f32 %v559, %v577
        %v594 = vmul.f32 %v561, %v578
        %v595 = vmul.f32 %v579, 0.044715
        %v596 = vmul.f32 %v580, 0.044715
        %v597 = vmul.f32 %v581, 0.044715
        %v598 = vmul.f32 %v582, 0.044715
        %v599 = vmul.f32 %v583, 0.044715
        %v600 = vmul.f32 %v584, 0.044715
        %v601 = vmul.f32 %v585, 0.044715
        %v602 = vmul.f32 %v586, 0.044715
        %v603 = vmul.f32 %v587, 0.044715
        %v604 = vmul.f32 %v588, 0.044715
        %v605 = vmul.f32 %v589, 0.044715
        %v606 = vmul.f32 %v590, 0.044715
        %v607 = vmul.f32 %v591, 0.044715
        %v608 = vmul.f32 %v592, 0.044715
        %v609 = vmul.f32 %v593, 0.044715
        %v610 = vmul.f32 %v594, 0.044715
        %v611 = vadd.f32 %v525, %v595
        %v612 = vadd.f32 %v527, %v596
        %v613 = vadd.f32 %v529, %v597
        %v614 = vadd.f32 %v531, %v598
        %v615 = vadd.f32 %v535, %v599
        %v616 = vadd.f32 %v537, %v600
        %v617 = vadd.f32 %v539, %v601
        %v618 = vadd.f32 %v541, %v602
        %v619 = vadd.f32 %v545, %v603
        %v620 = vadd.f32 %v547, %v604
        %v621 = vadd.f32 %v549, %v605
        %v622 = vadd.f32 %v551, %v606
        %v623 = vadd.f32 %v555, %v607
        %v624 = vadd.f32 %v557, %v608
        %v625 = vadd.f32 %v559, %v609
        %v626 = vadd.f32 %v561, %v610
        %v627 = vmul.f32 %v611, 0.7978846
        %v628 = vmul.f32 %v612, 0.7978846
        %v629 = vmul.f32 %v613, 0.7978846
        %v630 = vmul.f32 %v614, 0.7978846
        %v631 = vmul.f32 %v615, 0.7978846
        %v632 = vmul.f32 %v616, 0.7978846
        %v633 = vmul.f32 %v617, 0.7978846
        %v634 = vmul.f32 %v618, 0.7978846
        %v635 = vmul.f32 %v619, 0.7978846
        %v636 = vmul.f32 %v620, 0.7978846
        %v637 = vmul.f32 %v621, 0.7978846
        %v638 = vmul.f32 %v622, 0.7978846
        %v639 = vmul.f32 %v623, 0.7978846
        %v640 = vmul.f32 %v624, 0.7978846
        %v641 = vmul.f32 %v625, 0.7978846
        %v642 = vmul.f32 %v626, 0.7978846
        %v643 = vtanh.pop %v627
        %v644 = vtanh.pop %v628
        %v645 = vtanh.pop %v629
        %v646 = vtanh.pop %v630
        %v647 = vtanh.pop %v631
        %v648 = vtanh.pop %v632
        %v649 = vtanh.pop %v633
        %v650 = vtanh.pop %v634
        %v651 = vtanh.pop %v635
        %v652 = vtanh.pop %v636
        %v653 = vtanh.pop %v637
        %v654 = vtanh.pop %v638
        %v655 = vtanh.pop %v639
        %v656 = vtanh.pop %v640
        %v657 = vtanh.pop %v641
        %v658 = vtanh.pop %v642
        %v659 = vadd.f32 %v643, 1.0
        %v660 = vadd.f32 %v644, 1.0
        %v661 = vadd.f32 %v645, 1.0
        %v662 = vadd.f32 %v646, 1.0
        %v663 = vadd.f32 %v647, 1.0
        %v664 = vadd.f32 %v648, 1.0
        %v665 = vadd.f32 %v649, 1.0
        %v666 = vadd.f32 %v650, 1.0
        %v667 = vadd.f32 %v651, 1.0
        %v668 = vadd.f32 %v652, 1.0
        %v669 = vadd.f32 %v653, 1.0
        %v670 = vadd.f32 %v654, 1.0
        %v671 = vadd.f32 %v655, 1.0
        %v672 = vadd.f32 %v656, 1.0
        %v673 = vadd.f32 %v657, 1.0
        %v674 = vadd.f32 %v658, 1.0
        %v675 = vmul.f32 %v659, 0.5
        %v676 = vmul.f32 %v660, 0.5
        %v677 = vmul.f32 %v661, 0.5
        %v678 = vmul.f32 %v662, 0.5
        %v679 = vmul.f32 %v663, 0.5
        %v680 = vmul.f32 %v664, 0.5
        %v681 = vmul.f32 %v665, 0.5
        %v682 = vmul.f32 %v666, 0.5
        %v683 = vmul.f32 %v667, 0.5
        %v684 = vmul.f32 %v668, 0.5
        %v685 = vmul.f32 %v669, 0.5
        %v686 = vmul.f32 %v670, 0.5
        %v687 = vmul.f32 %v671, 0.5
        %v688 = vmul.f32 %v672, 0.5
        %v689 = vmul.f32 %v673, 0.5
        %v690 = vmul.f32 %v674, 0.5
        %v691 = vmul.f32 %v525, %v675
        %v692 = vmul.f32 %v527, %v676
        %v693 = vmul.f32 %v529, %v677
        %v694 = vmul.f32 %v531, %v678
        %v695 = vmul.f32 %v535, %v679
        %v696 = vmul.f32 %v537, %v680
        %v697 = vmul.f32 %v539, %v681
        %v698 = vmul.f32 %v541, %v682
        %v699 = vmul.f32 %v545, %v683
        %v700 = vmul.f32 %v547, %v684
        %v701 = vmul.f32 %v549, %v685
        %v702 = vmul.f32 %v551, %v686
        %v703 = vmul.f32 %v555, %v687
        %v704 = vmul.f32 %v557, %v688
        %v705 = vmul.f32 %v559, %v689
        %v706 = vmul.f32 %v561, %v690
        %v707 = vpack.c.bf16 %v693, %v691
        %v708 = vpack.c.bf16 %v694, %v692
        %v709 = vpack.c.bf16 %v697, %v695
        %v710 = vpack.c.bf16 %v698, %v696
        %v711 = vpack.c.bf16 %v701, %v699
        %v712 = vpack.c.bf16 %v702, %v700
        %v713 = vpack.c.bf16 %v705, %v703
        %v714 = vpack.c.bf16 %v706, %v704
        %v715 = vld [vmem:[#allocation2] sm:$0xff]
        %v716 = vld [vmem:[#allocation2 + $0x8] sm:$0xff]
        %v717 = vld [vmem:[#allocation2 + $0x10] sm:$0xff]
        %v718 = vld [vmem:[#allocation2 + $0x18] sm:$0xff]
        %v719 = vld [vmem:[#allocation2 + $0x20] sm:$0xff]
        %v720 = vld [vmem:[#allocation2 + $0x28] sm:$0xff]
        %v721 = vld [vmem:[#allocation2 + $0x30] sm:$0xff]
        %v722 = vld [vmem:[#allocation2 + $0x38] sm:$0xff]
        %v723 = vld [vmem:[#allocation8] sm:$0xf]
        %v724 = vld [vmem:[#allocation8 + $0x4] sm:$0xf]
        %v725 = vld [vmem:[#allocation8 + $0x8] sm:$0xf]
        %v726 = vld [vmem:[#allocation8 + $0xc] sm:$0xf]
        %v727 = vld [vmem:[#allocation8 + $0x10] sm:$0xf]
        %v728 = vld [vmem:[#allocation8 + $0x14] sm:$0xf]
        %v729 = vld [vmem:[#allocation8 + $0x18] sm:$0xf]
        %v730 = vld [vmem:[#allocation8 + $0x1c] sm:$0xf]
        %v731 = vld [vmem:[#allocation8 + $0x20] sm:$0xf]
        %v732 = vld [vmem:[#allocation8 + $0x24] sm:$0xf]
        %v733 = vld [vmem:[#allocation8 + $0x28] sm:$0xf]
        %v734 = vld [vmem:[#allocation8 + $0x2c] sm:$0xf]
        %v735 = vld [vmem:[#allocation8 + $0x30] sm:$0xf]
        %v736 = vld [vmem:[#allocation8 + $0x34] sm:$0xf]
        %v737 = vld [vmem:[#allocation8 + $0x38] sm:$0xf]
        %v738 = vld [vmem:[#allocation8 + $0x3c] sm:$0xf]
        %v739 = vld [vmem:[#allocation8 + $0x40] sm:$0xf]
        %v740 = vld [vmem:[#allocation8 + $0x44] sm:$0xf]
        %v741 = vld [vmem:[#allocation8 + $0x48] sm:$0xf]
        %v742 = vld [vmem:[#allocation8 + $0x4c] sm:$0xf]
        %v743 = vld [vmem:[#allocation8 + $0x50] sm:$0xf]
        %v744 = vld [vmem:[#allocation8 + $0x54] sm:$0xf]
        %v745 = vld [vmem:[#allocation8 + $0x58] sm:$0xf]
        %v746 = vld [vmem:[#allocation8 + $0x5c] sm:$0xf]
        %v747 = vld [vmem:[#allocation8 + $0x60] sm:$0xf]
        %v748 = vld [vmem:[#allocation8 + $0x64] sm:$0xf]
        %v749 = vld [vmem:[#allocation8 + $0x68] sm:$0xf]
        %v750 = vld [vmem:[#allocation8 + $0x6c] sm:$0xf]
        %v751 = vld [vmem:[#allocation8 + $0x70] sm:$0xf]
        %v752 = vld [vmem:[#allocation8 + $0x74] sm:$0xf]
        %v753 = vld [vmem:[#allocation8 + $0x78] sm:$0xf]
        %v754 = vld [vmem:[#allocation8 + $0x7c] sm:$0xf]
        %v787 = vunpack.c.l.b16 %v723
        %v788 = vunpack.c.l.b16 %v724
        %v789 = vunpack.c.l.b16 %v725
        %v790 = vunpack.c.l.b16 %v726
        %v791 = vunpack.c.l.b16 %v727
        %v792 = vunpack.c.l.b16 %v728
        %v793 = vunpack.c.l.b16 %v729
        %v794 = vunpack.c.l.b16 %v730
        %v795 = vunpack.c.l.b16 %v731
        %v796 = vunpack.c.l.b16 %v732
        %v797 = vunpack.c.l.b16 %v733
        %v798 = vunpack.c.l.b16 %v734
        %v799 = vunpack.c.l.b16 %v735
        %v800 = vunpack.c.l.b16 %v736
        %v801 = vunpack.c.l.b16 %v737
        %v802 = vunpack.c.l.b16 %v738
        %v803 = vunpack.c.l.b16 %v739
        %v804 = vunpack.c.l.b16 %v740
        %v805 = vunpack.c.l.b16 %v741
        %v806 = vunpack.c.l.b16 %v742
        %v807 = vunpack.c.l.b16 %v743
        %v808 = vunpack.c.l.b16 %v744
        %v809 = vunpack.c.l.b16 %v745
        %v810 = vunpack.c.l.b16 %v746
        %v811 = vunpack.c.l.b16 %v747
        %v812 = vunpack.c.l.b16 %v748
        %v813 = vunpack.c.l.b16 %v749
        %v814 = vunpack.c.l.b16 %v750
        %v815 = vunpack.c.l.b16 %v751
        %v816 = vunpack.c.l.b16 %v752
        %v817 = vunpack.c.l.b16 %v753
        %v818 = vunpack.c.l.b16 %v754
        %v819 = vpack.c.b16 %v788, %v787
        %v820 = vpack.c.b16 %v790, %v789
        %v821 = vpack.c.b16 %v792, %v791
        %v822 = vpack.c.b16 %v794, %v793
        %v823 = vpack.c.b16 %v796, %v795
        %v824 = vpack.c.b16 %v798, %v797
        %v825 = vpack.c.b16 %v800, %v799
        %v826 = vpack.c.b16 %v802, %v801
        %v827 = vpack.c.b16 %v804, %v803
        %v828 = vpack.c.b16 %v806, %v805
        %v829 = vpack.c.b16 %v808, %v807
        %v830 = vpack.c.b16 %v810, %v809
        %v831 = vpack.c.b16 %v812, %v811
        %v832 = vpack.c.b16 %v814, %v813
        %v833 = vpack.c.b16 %v816, %v815
        %v834 = vpack.c.b16 %v818, %v817
        %851 = vmatprep.subr.bf16.mxu0 0
        %852 = vmatpush1.bf16.msra.mxu0 %v819
        %853 = vmatprep.subr.bf16.mxu0 0
        %854 = vmatpush1.bf16.msra.mxu0 %v820
        %855 = vmatprep.subr.bf16.mxu0 0
        %856 = vmatpush1.bf16.msra.mxu0 %v821
        %857 = vmatprep.subr.bf16.mxu0 0
        %858 = vmatpush1.bf16.msra.mxu0 %v822
        %859 = vmatprep.subr.bf16.mxu0 0
        %860 = vmatpush1.bf16.msra.mxu0 %v823
        %861 = vmatprep.subr.bf16.mxu0 0
        %862 = vmatpush1.bf16.msra.mxu0 %v824
        %863 = vmatprep.subr.bf16.mxu0 0
        %864 = vmatpush1.bf16.msra.mxu0 %v825
        %865 = vmatprep.subr.bf16.mxu0 0
        %866 = vmatpush1.bf16.msra.mxu0 %v826
        %867 = vmatprep.subr.bf16.mxu0 0
        %868 = vmatpush1.bf16.msra.mxu0 %v827
        %869 = vmatprep.subr.bf16.mxu0 0
        %870 = vmatpush1.bf16.msra.mxu0 %v828
        %871 = vmatprep.subr.bf16.mxu0 0
        %872 = vmatpush1.bf16.msra.mxu0 %v829
        %873 = vmatprep.subr.bf16.mxu0 0
        %874 = vmatpush1.bf16.msra.mxu0 %v830
        %875 = vmatprep.subr.bf16.mxu0 0
        %876 = vmatpush1.bf16.msra.mxu0 %v831
        %877 = vmatprep.subr.bf16.mxu0 0
        %878 = vmatpush1.bf16.msra.mxu0 %v832
        %879 = vmatprep.subr.bf16.mxu0 0
        %880 = vmatpush1.bf16.msra.mxu0 %v833
        %881 = vmatprep.subr.bf16.mxu0 0
        %882 = vmatpush1.bf16.msra.mxu0 %v834
        %883 = vmatprep.mubr.bf16.mxu0 %v708
        %884 = vmatmul.mubr.bf16.gmra.mrb[0].mxu0 %v707
        %v885 = vpop.f32.mrb[0].mxu0
        %v886 = vadd.f32 0.0, %v885
        %v887 = vpop.f32.mrb[0].mxu0
        %v888 = vpop.f32.mrb[0].mxu0
        %v889 = vadd.f32 0.0, %v888
        %v890 = vpop.f32.mrb[0].mxu0
        %891 = vmatprep.mubr.bf16.mxu0 %v710
        %892 = vmatmul.mubr.bf16.gmra.mrb[0].mxu0 %v709
        %v893 = vpop.f32.mrb[0].mxu0
        %v894 = vadd.f32 0.0, %v893
        %v895 = vpop.f32.mrb[0].mxu0
        %v896 = vpop.f32.mrb[0].mxu0
        %v897 = vadd.f32 0.0, %v896
        %v898 = vpop.f32.mrb[0].mxu0
        %899 = vmatprep.mubr.bf16.mxu0 %v712
        %900 = vmatmul.mubr.bf16.gmra.mrb[0].mxu0 %v711
        %v901 = vpop.f32.mrb[0].mxu0
        %v902 = vadd.f32 0.0, %v901
        %v903 = vpop.f32.mrb[0].mxu0
        %v904 = vpop.f32.mrb[0].mxu0
        %v905 = vadd.f32 0.0, %v904
        %v906 = vpop.f32.mrb[0].mxu0
        %907 = vmatprep.mubr.bf16.mxu0 %v714
        %908 = vmatmul.mubr.bf16.gmra.mrb[0].mxu0 %v713
        %v909 = vpop.f32.mrb[0].mxu0
        %v910 = vadd.f32 0.0, %v909
        %v911 = vpop.f32.mrb[0].mxu0
        %v912 = vpop.f32.mrb[0].mxu0
        %v913 = vadd.f32 0.0, %v912
        %v914 = vpop.f32.mrb[0].mxu0
        %915 = vdwg.mxu0
        %v916 = vadd.f32 %v715, %v886
        %v917 = vadd.f32 %v716, %v889
        %v918 = vadd.f32 %v717, %v894
        %v919 = vadd.f32 %v718, %v897
        %v920 = vadd.f32 %v719, %v902
        %v921 = vadd.f32 %v720, %v905
        %v922 = vadd.f32 %v721, %v910
        %v923 = vadd.f32 %v722, %v913
        %924 = vst [vmem:[#allocation2] sm:$0xff] %v916
        %925 = vst [vmem:[#allocation2 + $0x8] sm:$0xff] %v917
        %926 = vst [vmem:[#allocation2 + $0x10] sm:$0xff] %v918
        %927 = vst [vmem:[#allocation2 + $0x18] sm:$0xff] %v919
        %928 = vst [vmem:[#allocation2 + $0x20] sm:$0xff] %v920
        %929 = vst [vmem:[#allocation2 + $0x28] sm:$0xff] %v921
        %930 = vst [vmem:[#allocation2 + $0x30] sm:$0xff] %v922
        %931 = vst [vmem:[#allocation2 + $0x38] sm:$0xff] %v923
        // Predicated region
        $region57: #{tpu_custom_call.1} parent=39 // pred_check
          %p932 = pneg %p338
        $region58: #{tpu_custom_call.1} parent=39 // pred_check_branch
          %934 = sbr.rel (%p932) target = $region60
        $region59: #{tpu_custom_call.1} parent=39 // pred_region
          %v935 = vld [vmem:[#allocation2] sm:$0xff]
          %v936 = vld [vmem:[#allocation2 + $0x8] sm:$0xff]
          %v937 = vld [vmem:[#allocation2 + $0x10] sm:$0xff]
          %v938 = vld [vmem:[#allocation2 + $0x18] sm:$0xff]
          %v939 = vld [vmem:[#allocation2 + $0x20] sm:$0xff]
          %v940 = vld [vmem:[#allocation2 + $0x28] sm:$0xff]
          %v941 = vld [vmem:[#allocation2 + $0x30] sm:$0xff]
          %v942 = vld [vmem:[#allocation2 + $0x38] sm:$0xff]
          %v943 = vld [vmem:[%s4] sm:$0x1]
          %v945 = vlaneseq
          %v946 = vshrl.u32 %v945, 7
          %v947 = vsub.s32 0, %v946
          %v948 = vrot.slane %v943, %v947
          %v950 = vadd.f32 %v935, %v948
          %v951 = vadd.f32 %v936, %v948
          %v952 = vadd.f32 %v937, %v948
          %v953 = vadd.f32 %v938, %v948
          %v954 = vadd.f32 %v939, %v948
          %v955 = vadd.f32 %v940, %v948
          %v956 = vadd.f32 %v941, %v948
          %v957 = vadd.f32 %v942, %v948
          %v958 = vpack.c.bf16 %v951, %v950
          %v959 = vpack.c.bf16 %v953, %v952
          %v960 = vpack.c.bf16 %v955, %v954
          %v961 = vpack.c.bf16 %v957, %v956
          %v966 = vunpack.c.l.b16 %v958
          %v967 = vunpack.c.h.b16 %v958
          %v968 = vunpack.c.l.b16 %v959
          %v969 = vunpack.c.h.b16 %v959
          %v970 = vunpack.c.l.b16 %v960
          %v971 = vunpack.c.h.b16 %v960
          %v972 = vunpack.c.l.b16 %v961
          %v973 = vunpack.c.h.b16 %v961
          %v974 = vpack.c.b16 %v966, %v966
          %v975 = vpack.c.b16 %v967, %v967
          %v976 = vpack.c.b16 %v968, %v968
          %v977 = vpack.c.b16 %v969, %v969
          %v978 = vpack.c.b16 %v970, %v970
          %v979 = vpack.c.b16 %v971, %v971
          %v980 = vpack.c.b16 %v972, %v972
          %v981 = vpack.c.b16 %v973, %v973
          %990 = vst [vmem:[%s319] sm:$0xf] %v974
          %991 = vst [vmem:[%s319 + $0x4] sm:$0xf] %v975
          %992 = vst [vmem:[%s319 + $0x8] sm:$0xf] %v976
          %993 = vst [vmem:[%s319 + $0xc] sm:$0xf] %v977
          %994 = vst [vmem:[%s319 + $0x10] sm:$0xf] %v978
          %995 = vst [vmem:[%s319 + $0x14] sm:$0xf] %v979
          %996 = vst [vmem:[%s319 + $0x18] sm:$0xf] %v980
          %997 = vst [vmem:[%s319 + $0x1c] sm:$0xf] %v981
        $region60: #{tpu_custom_call.1} parent=39 // pred_fallthru
          _
        %s998 = sand.u32 %s168, 1
        %s999 = scalar_lea.sflag [#allocation5], %s998
        %s1000 = sand.u32 %s168, 1
        %s1001 = smul.addr %s1000, 32
        %s1002 = scalar_lea.vmem [#allocation9], %s1001
        // Predicated region
        $region61: #{tpu_custom_call.1} parent=39 // pred_check
          %p1003 = pneg %p178
        $region62: #{tpu_custom_call.1} parent=39 // pred_check_branch
          %1005 = sbr.rel (%p1003) target = $region64
        $region63: #{tpu_custom_call.1} parent=39 // pred_region
          %s1006 = smul.u32 8, %s27
          %s1007 = ssub.s32 13, %s1006
          %p1008 = scmp.lt.s32.totalorder %s1007, 8
          %s1009 = scalar_select %p1008, %s1007, 8
          %s1010 = smul.u32 64, %s1009
          %s1012 = ssub.s32 512, %s1010
          %1013 = vsyncadd %s999, %s1012
          %p1014 = scmp.ne.s32.totalorder 0, %s1010
          %s1015 = smul.addr %s1006, 64
          %s1016 = scalar_lea.hbm %s5, %s1015
          %s1017 = smul.u32 4, %s1009
          %s1018 = sshll.u32 %s1002, 4
          %s1019 = int_to_ptr.vmem [resolvable:$true] %s1018
          %s1020 = sshll.u32 %s1017, 4
          %1024 = dma.vmem_to_hbm [thread:$0]  (%p1014), %s1019, %s1020, %s1016, %s999, 64, 64, 4
        $region64: #{tpu_custom_call.1} parent=39 // pred_fallthru
          _
      $region40: #{tpu_custom_call.1} parent=5 // pred_fallthru
        _
      %p1025 = scmp.le.s32.totalorder 2, %s18
      // Predicated region
      $region65: #{tpu_custom_call.1} parent=5 // pred_check
        %p1026 = pneg %p1025
      $region66: #{tpu_custom_call.1} parent=5 // pred_check_branch
        %1028 = sbr.rel (%p1026) target = $region68
      $region67: #{tpu_custom_call.1} parent=5 // pred_region
        %s1029 = ssub.s32 %s18, 2
        // Predicated region
        $region69: #{tpu_custom_call.1} parent=67 // pred_check
          %p1030 = pneg %p184
        $region70: #{tpu_custom_call.1} parent=67 // pred_check_branch
          %1032 = sbr.rel (%p1030) target = $region72
        $region71: #{tpu_custom_call.1} parent=67 // pred_region
          %s1033 = sand.u32 %s169, 1
          %s1034 = scalar_lea.sflag [#allocation5], %s1033
          %s1035 = sand.u32 %s169, 1
          %s1036 = smul.addr %s1035, 32
          %s1037 = scalar_lea.vmem [#allocation9], %s1036
          %1038 = dma.done %s1034, 512
        $region72: #{tpu_custom_call.1} parent=67 // pred_fallthru
          _
      $region68: #{tpu_custom_call.1} parent=5 // pred_fallthru
        _
    $region6: #{tpu_custom_call.1} parent=1 // loop_footer
      %s22 = sadd.s32 1, %s18
    $region7: #{tpu_custom_call.1} parent=1 // loop_footer_branch
      %17 = sbr.rel target = $region3
    $region8: #{tpu_custom_call.1} parent=1 // loop_exit
      _
    %1039 = vsyncpa [#allocation4], 1
    %s1040 = scalar_lea.sflag [#allocation4], 1
    %1041 = vsyncpa %s1040, 1
    %1042 = vsyncpa [#allocation7], 1
    %1043 = vsyncpa [#allocation5], 1
    %s1044 = scalar_lea.sflag [#allocation5], 1
    %1045 = vsyncpa %s1044, 1

// kernel: tpu_custom_call.1
$region0: #{tpu_custom_call.1}
  #allocation0 [shape = 'u32[]', space=smem, size = 0x4, offset = 0x4, fixed_abs, tag = 'smem constant byte address 0x4 - core index']
  #allocation1 [shape = 'u32[144,128]{1,0:T(1,128)}', space=vmem, size = 0x12000, scoped, tag = 'internal scratch']
  #allocation2 [shape = 'f32[64,128]{1,0:T(8,128)}', space=vmem, size = 0x8000, scoped, tag = 'scratch operand']
  %s0 = inlined_call_operand.hbm [shape: bf16[100,128], index: 0, kind: input, shape index: {}]
  %s1 = inlined_call_operand.hbm [shape: bf16[128,256], index: 1, kind: input, shape index: {}]
  %s2 = inlined_call_operand.vmem [shape: f32[1,256], index: 2, kind: input, shape index: {}]
  %s3 = inlined_call_operand.hbm [shape: bf16[256,128], index: 3, kind: input, shape index: {}]
  %s4 = inlined_call_operand.vmem [shape: f32[1,128], index: 4, kind: input, shape index: {}]
  %s5 = inlined_call_operand.hbm [shape: bf16[100,128], index: 5, kind: output, shape index: {}]
  %s6 = sld [smem:[#allocation0]]
  $region73: #{tpu_custom_call.1} parent=0
    _
  %s8 = ssub.s32 1, %s6
  %s9 = scalar_select 0, %s8, %s6
  $region1: #{tpu_custom_call.1} parent=0
    #allocation3 [shape = 'u8[32768]{0}', space=vmem, size = 0x8000, scoped, tag = 'input window, operand 0']
    #allocation4 [shape = 's32[2]{0}', space=sflag, size = 0x8, scoped, tag = 'scoped memory for tpu_custom_call.1']
    #allocation5 [shape = 's32[2]{0}', space=sflag, size = 0x8, scoped, tag = 'scoped memory for tpu_custom_call.1']
    #allocation6 [shape = 'u8[65536]{0}', space=vmem, size = 0x10000, scoped, tag = 'input window, operand 1, single buffered']
    #allocation7 [shape = 's32[1]{0}', space=sflag, size = 0x4, scoped, tag = 'scoped memory for tpu_custom_call.1']
    #allocation8 [shape = 'u8[65536]{0}', space=vmem, size = 0x10000, scoped, tag = 'input window, operand 3, single buffered']
    #allocation9 [shape = 'u8[32768]{0}', space=vmem, size = 0x8000, scoped, tag = 'output window, operand 0']
    %10 = vsyncpa [#allocation4], 0
    %s11 = scalar_lea.sflag [#allocation4], 1
    %12 = vsyncpa %s11, 0
    %13 = vsyncpa [#allocation7], 0
    %14 = vsyncpa [#allocation5], 0
    %s15 = scalar_lea.sflag [#allocation5], 1
    %16 = vsyncpa %s15, 0
    loop: start=0, step=1, limit=4
    $region2: #{tpu_custom_call.1} parent=1 // loop_pre_header
      _
    $region3: #{tpu_custom_call.1} parent=1 // loop_header
      %s18 = sphi 0, %s22
      %p19 = scmp.ge.s32.totalorder %s18, 4
      %s25 = sphi 0, %s37
      %s26 = sphi 0, %s33
      %s27 = sphi 0, %s25
      %s28 = sphi 0, %s26
      %s29 = sphi 0, %s27
      %s30 = sphi 0, %s28
      %s40 = sphi 0, %s42
      %s43 = sphi 0, %s40
      %s44 = sphi 0, %s43
      %s60 = sphi 0, %s44
      %s66 = sphi 0, %s68
      %s69 = sphi 0, %s66
      %s70 = sphi 0, %s69
      %s86 = sphi 0, %s70
      %s92 = sphi 0, %s94
      %s95 = sphi 0, %s92
      %s96 = sphi 0, %s95
      %s112 = sphi 0, %s96
      %s118 = sphi 0, %s120
      %s121 = sphi 0, %s118
      %s122 = sphi 0, %s121
      %s138 = sphi 0, %s122
      %s142 = sphi 0, %s142
      %s144 = sphi 0, %s142
      %s145 = sphi 0, %s144
      %s159 = sphi 0, %s145
      %s165 = sphi 0, %s167
      %s168 = sphi 0, %s165
      %s169 = sphi 0, %s168
      %s185 = sphi 0, %s169
    $region4: #{tpu_custom_call.1} parent=1 // loop_header_branch
      %21 = sbr.rel (%p19) target = $region8
    $region5: #{tpu_custom_call.1} parent=1 // loop_body
      %s23 = ssub.s32 %s18, 1
      %s24 = ssub.s32 %s18, 2
      %s31 = sadd.s32 1, %s26
      %p32 = scmp.ge.s32.totalorder %s31, 1
      %s33 = scalar_select %p32, 0, %s31
      %s34 = sadd.s32 1, %s25
      %s35 = scalar_select %p32, %s34, %s25
      %p36 = scmp.ge.s32.totalorder %s35, 2
      %s37 = scalar_select %p36, 0, %s35
      %s38 = ssub.s32 %s25, %s37
      %p39 = scmp.eq.s32.totalorder %s38, 0
      %s41 = sadd.s32 %s40, 1
      %s42 = scalar_select %p39, %s40, %s41
      %p45 = pneg %p39
      %p46 = scmp.eq.s32.totalorder %s18, 1
      %p47 = por %p45, %p46
      %p48 = scmp.ne.s32.totalorder %s40, %s43
      %p49 = scmp.eq.s32.totalorder %s18, 0
      %p50 = por %p48, %p49
      %p51 = scmp.ne.s32.totalorder %s40, %s43
      %p52 = scmp.eq.s32.totalorder %s23, 1
      %p53 = por %p51, %p52
      %p54 = scmp.ne.s32.totalorder %s43, %s44
      %p55 = scmp.eq.s32.totalorder %s23, 0
      %p56 = por %p54, %p55
      %p57 = scmp.ne.s32.totalorder %s43, %s44
      %p58 = scmp.eq.s32.totalorder %s24, 1
      %p59 = por %p57, %p58
      %p61 = scmp.ne.s32.totalorder %s44, %s60
      %p62 = scmp.eq.s32.totalorder %s24, 0
      %p63 = por %p61, %p62
      %s64 = ssub.s32 %s26, %s33
      %p65 = scmp.eq.s32.totalorder %s64, 0
      %s67 = sadd.s32 %s66, 1
      %s68 = scalar_select %p65, %s66, %s67
      %p71 = pneg %p65
      %p72 = scmp.eq.s32.totalorder %s18, 1
      %p73 = por %p71, %p72
      %p74 = scmp.ne.s32.totalorder %s66, %s69
      %p75 = scmp.eq.s32.totalorder %s18, 0
      %p76 = por %p74, %p75
      %p77 = scmp.ne.s32.totalorder %s66, %s69
      %p78 = scmp.eq.s32.totalorder %s23, 1
      %p79 = por %p77, %p78
      %p80 = scmp.ne.s32.totalorder %s69, %s70
      %p81 = scmp.eq.s32.totalorder %s23, 0
      %p82 = por %p80, %p81
      %p83 = scmp.ne.s32.totalorder %s69, %s70
      %p84 = scmp.eq.s32.totalorder %s24, 1
      %p85 = por %p83, %p84
      %p87 = scmp.ne.s32.totalorder %s70, %s86
      %p88 = scmp.eq.s32.totalorder %s24, 0
      %p89 = por %p87, %p88
      %s90 = ssub.s32 %s26, %s33
      %p91 = scmp.eq.s32.totalorder %s90, 0
      %s93 = sadd.s32 %s92, 1
      %s94 = scalar_select %p91, %s92, %s93
      %p97 = pneg %p91
      %p98 = scmp.eq.s32.totalorder %s18, 1
      %p99 = por %p97, %p98
      %p100 = scmp.ne.s32.totalorder %s92, %s95
      %p101 = scmp.eq.s32.totalorder %s18, 0
      %p102 = por %p100, %p101
      %p103 = scmp.ne.s32.totalorder %s92, %s95
      %p104 = scmp.eq.s32.totalorder %s23, 1
      %p105 = por %p103, %p104
      %p106 = scmp.ne.s32.totalorder %s95, %s96
      %p107 = scmp.eq.s32.totalorder %s23, 0
      %p108 = por %p106, %p107
      %p109 = scmp.ne.s32.totalorder %s95, %s96
      %p110 = scmp.eq.s32.totalorder %s24, 1
      %p111 = por %p109, %p110
      %p113 = scmp.ne.s32.totalorder %s96, %s112
      %p114 = scmp.eq.s32.totalorder %s24, 0
      %p115 = por %p113, %p114
      %s116 = ssub.s32 %s26, %s33
      %p117 = scmp.eq.s32.totalorder %s116, 0
      %s119 = sadd.s32 %s118, 1
      %s120 = scalar_select %p117, %s118, %s119
      %p123 = pneg %p117
      %p124 = scmp.eq.s32.totalorder %s18, 1
      %p125 = por %p123, %p124
      %p126 = scmp.ne.s32.totalorder %s118, %s121
      %p127 = scmp.eq.s32.totalorder %s18, 0
      %p128 = por %p126, %p127
      %p129 = scmp.ne.s32.totalorder %s118, %s121
      %p130 = scmp.eq.s32.totalorder %s23, 1
      %p131 = por %p129, %p130
      %p132 = scmp.ne.s32.totalorder %s121, %s122
      %p133 = scmp.eq.s32.totalorder %s23, 0
      %p134 = por %p132, %p133
      %p135 = scmp.ne.s32.totalorder %s121, %s122
      %p136 = scmp.eq.s32.totalorder %s24, 1
      %p137 = por %p135, %p136
      %p139 = scmp.ne.s32.totalorder %s122, %s138
      %p140 = scmp.eq.s32.totalorder %s24, 0
      %p141 = por %p139, %p140
      %s143 = sadd.s32 %s142, 1
      %p146 = scmp.eq.s32.totalorder %s18, 1
      %p147 = scmp.ne.s32.totalorder %s142, %s144
      %p148 = scmp.eq.s32.totalorder %s18, 0
      %p149 = por %p147, %p148
      %p150 = scmp.ne.s32.totalorder %s142, %s144
      %p151 = scmp.eq.s32.totalorder %s23, 1
      %p152 = por %p150, %p151
      %p153 = scmp.ne.s32.totalorder %s144, %s145
      %p154 = scmp.eq.s32.totalorder %s23, 0
      %p155 = por %p153, %p154
      %p156 = scmp.ne.s32.totalorder %s144, %s145
      %p157 = scmp.eq.s32.totalorder %s24, 1
      %p158 = por %p156, %p157
      %p160 = scmp.ne.s32.totalorder %s145, %s159
      %p161 = scmp.eq.s32.totalorder %s24, 0
      %p162 = por %p160, %p161
      %s163 = ssub.s32 %s25, %s37
      %p164 = scmp.eq.s32.totalorder %s163, 0
      %s166 = sadd.s32 %s165, 1
      %s167 = scalar_select %p164, %s165, %s166
      %p170 = pneg %p164
      %p171 = scmp.eq.s32.totalorder %s18, 1
      %p172 = por %p170, %p171
      %p173 = scmp.ne.s32.totalorder %s165, %s168
      %p174 = scmp.eq.s32.totalorder %s18, 0
      %p175 = por %p173, %p174
      %p176 = scmp.ne.s32.totalorder %s165, %s168
      %p177 = scmp.eq.s32.totalorder %s23, 1
      %p178 = por %p176, %p177
      %p179 = scmp.ne.s32.totalorder %s168, %s169
      %p180 = scmp.eq.s32.totalorder %s23, 0
      %p181 = por %p179, %p180
      %p182 = scmp.ne.s32.totalorder %s168, %s169
      %p183 = scmp.eq.s32.totalorder %s24, 1
      %p184 = por %p182, %p183
      %p186 = scmp.ne.s32.totalorder %s169, %s185
      %p187 = scmp.eq.s32.totalorder %s24, 0
      %p188 = por %p186, %p187
      %p189 = scmp.le.s32.totalorder 1, %s18
      %p190 = scmp.lt.s32.totalorder %s18, 3
      %p191 = pnand %p189, %p190
      %p192 = pneg %p191
      // Predicated region
      $region9: #{tpu_custom_call.1} parent=5 // pred_check
        _
      $region10: #{tpu_custom_call.1} parent=5 // pred_check_branch
        %194 = sbr.rel (%p191) target = $region12
      $region11: #{tpu_custom_call.1} parent=5 // pred_region
        %s195 = ssub.s32 %s18, 1
        // Predicated region
        $region13: #{tpu_custom_call.1} parent=11 // pred_check
          %p196 = pneg %p82
        $region14: #{tpu_custom_call.1} parent=11 // pred_check_branch
          %198 = sbr.rel (%p196) target = $region16
        $region15: #{tpu_custom_call.1} parent=11 // pred_region
          %s199 = smul.u32 2, %s28
          %s201 = ssub.s32 2048, 2048
          %202 = vsyncadd [#allocation7], %s201
          %s203 = smul.addr %s199, 64
          %s204 = scalar_lea.hbm %s1, %s203
          %s205 = sshll.u32 [#allocation6], 4
          %s206 = int_to_ptr.vmem [resolvable:$true] %s205
          %211 = dma.hbm_to_vmem [thread:$0]  %s204, 2048, %s206, [#allocation7], 128, 128, 8
        $region16: #{tpu_custom_call.1} parent=11 // pred_fallthru
          _
        // Predicated region
        $region17: #{tpu_custom_call.1} parent=11 // pred_check
          %p212 = pneg %p108
        $region18: #{tpu_custom_call.1} parent=11 // pred_check_branch
          %214 = sbr.rel (%p212) target = $region20
        $region19: #{tpu_custom_call.1} parent=11 // pred_region
          %s215 = smul.u32 2, %s28
          %p216 = scmp.lt.s32.totalorder %s215, 1
          %s217 = scalar_select %p216, %s215, 1
          %s218 = scalar_lea.vmem %s2, %s217
          %s219 = smul.u32 2, %s28
        $region20: #{tpu_custom_call.1} parent=11 // pred_fallthru
          _
        // Predicated region
        $region21: #{tpu_custom_call.1} parent=11 // pred_check
          %p220 = pneg %p134
        $region22: #{tpu_custom_call.1} parent=11 // pred_check_branch
          %222 = sbr.rel (%p220) target = $region24
        $region23: #{tpu_custom_call.1} parent=11 // pred_region
          %s223 = smul.u32 32, %s28
          %s225 = ssub.s32 2048, 2048
          %226 = vsyncadd [#allocation7], %s225
          %s227 = smul.addr %s223, 64
          %s228 = scalar_lea.hbm %s3, %s227
          %s229 = sshll.u32 [#allocation8], 4
          %s230 = int_to_ptr.vmem [resolvable:$true] %s229
          %235 = dma.hbm_to_vmem [thread:$0]  %s228, 2048, %s230, [#allocation7], 64, 64, 4
        $region24: #{tpu_custom_call.1} parent=11 // pred_fallthru
          _
        // Predicated region
        $region25: #{tpu_custom_call.1} parent=11 // pred_check
          %p236 = pneg %p155
        $region26: #{tpu_custom_call.1} parent=11 // pred_check_branch
          %238 = sbr.rel (%p236) target = $region28
        $region27: #{tpu_custom_call.1} parent=11 // pred_region
          _
        $region28: #{tpu_custom_call.1} parent=11 // pred_fallthru
          _
      $region12: #{tpu_custom_call.1} parent=5 // pred_fallthru
        _
      %p239 = scmp.lt.s32.totalorder %s18, 2
      // Predicated region
      $region29: #{tpu_custom_call.1} parent=5 // pred_check
        %p240 = pneg %p239
      $region30: #{tpu_custom_call.1} parent=5 // pred_check_branch
        %242 = sbr.rel (%p240) target = $region32
      $region31: #{tpu_custom_call.1} parent=5 // pred_region
        // Predicated region
        $region33: #{tpu_custom_call.1} parent=31 // pred_check
          %p243 = pneg %p50
        $region34: #{tpu_custom_call.1} parent=31 // pred_check_branch
          %245 = sbr.rel (%p243) target = $region36
        $region35: #{tpu_custom_call.1} parent=31 // pred_region
          %s246 = sand.u32 %s40, 1
          %s247 = scalar_lea.sflag [#allocation4], %s246
          %s248 = sand.u32 %s40, 1
          %s249 = smul.addr %s248, 32
          %s250 = scalar_lea.vmem [#allocation3], %s249
          %s251 = smul.u32 8, %s25
          %s252 = ssub.s32 13, %s251
          %p253 = scmp.lt.s32.totalorder %s252, 8
          %s254 = scalar_select %p253, %s252, 8
          %s255 = smul.u32 64, %s254
          %s257 = ssub.s32 512, %s255
          %258 = vsyncadd %s247, %s257
          %p259 = scmp.ne.s32.totalorder 0, %s255
          %s260 = smul.addr %s251, 64
          %s261 = scalar_lea.hbm %s0, %s260
          %s262 = smul.u32 4, %s254
          %s263 = sshll.u32 %s250, 4
          %s264 = int_to_ptr.vmem [resolvable:$true] %s263
          %s265 = sshll.u32 %s262, 4
          %269 = dma.hbm_to_vmem [thread:$0]  (%p259), %s261, %s265, %s264, %s247, 64, 64, 4
        $region36: #{tpu_custom_call.1} parent=31 // pred_fallthru
          _
      $region32: #{tpu_custom_call.1} parent=5 // pred_fallthru
        _
      %p270 = scmp.le.s32.totalorder 1, %s18
      %p271 = scmp.lt.s32.totalorder %s18, 3
      %p272 = pnand %p270, %p271
      %p273 = pneg %p272
      // Predicated region
      $region37: #{tpu_custom_call.1} parent=5 // pred_check
        _
      $region38: #{tpu_custom_call.1} parent=5 // pred_check_branch
        %275 = sbr.rel (%p272) target = $region40
      $region39: #{tpu_custom_call.1} parent=5 // pred_region
        %s276 = ssub.s32 %s18, 1
        %s277 = sand.u32 %s43, 1
        %s278 = scalar_lea.sflag [#allocation4], %s277
        %s279 = sand.u32 %s43, 1
        %s280 = smul.addr %s279, 32
        %s281 = scalar_lea.vmem [#allocation3], %s280
        // Predicated region
        $region41: #{tpu_custom_call.1} parent=39 // pred_check
          %p282 = pneg %p56
        $region42: #{tpu_custom_call.1} parent=39 // pred_check_branch
          %284 = sbr.rel (%p282) target = $region44
        $region43: #{tpu_custom_call.1} parent=39 // pred_region
          %285 = dma.done %s278, 512
        $region44: #{tpu_custom_call.1} parent=39 // pred_fallthru
          _
        // Predicated region
        $region45: #{tpu_custom_call.1} parent=39 // pred_check
          %p286 = pneg %p82
        $region46: #{tpu_custom_call.1} parent=39 // pred_check_branch
          %288 = sbr.rel (%p286) target = $region48
        $region47: #{tpu_custom_call.1} parent=39 // pred_region
          %289 = dma.done [#allocation7], 2048
        $region48: #{tpu_custom_call.1} parent=39 // pred_fallthru
          _
        // Predicated region
        $region49: #{tpu_custom_call.1} parent=39 // pred_check
          %p290 = pneg %p134
        $region50: #{tpu_custom_call.1} parent=39 // pred_check_branch
          %292 = sbr.rel (%p290) target = $region52
        $region51: #{tpu_custom_call.1} parent=39 // pred_region
          %293 = dma.done [#allocation7], 2048
        $region52: #{tpu_custom_call.1} parent=39 // pred_fallthru
          _
        %s294 = sand.u32 %s43, 1
        %s295 = scalar_lea.sflag [#allocation4], %s294
        %s296 = sand.u32 %s43, 1
        %s297 = smul.addr %s296, 32
        %s298 = scalar_lea.vmem [#allocation3], %s297
        %p299 = pneg %p56
        %p300 = pneg %p53
        %p301 = pneg %p82
        %p302 = pneg %p79
        %s303 = smul.u32 2, %s28
        %p304 = scmp.lt.s32.totalorder %s303, 1
        %s305 = scalar_select %p304, %s303, 1
        %s306 = scalar_lea.vmem %s2, %s305
        %p307 = pneg %p108
        %p308 = pneg %p105
        %p309 = pneg %p134
        %p310 = pneg %p131
        %p311 = pneg %p155
        %p312 = pneg %p152
        %p313 = pneg %p181
        %p314 = pneg %p178
        %s315 = sand.u32 %s168, 1
        %s316 = scalar_lea.sflag [#allocation5], %s315
        %s317 = sand.u32 %s168, 1
        %s318 = smul.addr %s317, 32
        %s319 = scalar_lea.vmem [#allocation9], %s318
        %s320 = smul.u32 8, %s27
        %s321 = ssub.s32 13, %s320
        %p322 = scmp.lt.s32.totalorder %s321, 8
        %s323 = scalar_select %p322, %s321, 8
        %s324 = smul.u32 64, %s323
        %s325 = smul.u32 2, %s28
        %s326 = smul.u32 2, %s28
        %p327 = scmp.lt.s32.totalorder %s326, 1
        %s328 = scalar_select %p327, %s326, 1
        %s329 = scalar_lea.vmem %s2, %s328
        %s330 = smul.u32 2, %s28
        %s331 = smul.u32 32, %s28
        %s332 = smul.u32 8, %s27
        %s333 = ssub.s32 13, %s332
        %p334 = scmp.lt.s32.totalorder %s333, 8
        %s335 = scalar_select %p334, %s333, 8
        %s336 = smul.u32 64, %s335
        %p338 = scmp.eq.s32.totalorder %s28, 0
        // Predicated region
        $region53: #{tpu_custom_call.1} parent=39 // pred_check
          %p339 = pneg %p338
        $region54: #{tpu_custom_call.1} parent=39 // pred_check_branch
          %341 = sbr.rel (%p339) target = $region56
        $region55: #{tpu_custom_call.1} parent=39 // pred_region
          %342 = vst [vmem:[#allocation2] sm:$0xff] 0.0
          %343 = vst [vmem:[#allocation2 + $0x8] sm:$0xff] 0.0
          %344 = vst [vmem:[#allocation2 + $0x10] sm:$0xff] 0.0
          %345 = vst [vmem:[#allocation2 + $0x18] sm:$0xff] 0.0
          %346 = vst [vmem:[#allocation2 + $0x20] sm:$0xff] 0.0
          %347 = vst [vmem:[#allocation2 + $0x28] sm:$0xff] 0.0
          %348 = vst [vmem:[#allocation2 + $0x30] sm:$0xff] 0.0
          %349 = vst [vmem:[#allocation2 + $0x38] sm:$0xff] 0.0
        $region56: #{tpu_custom_call.1} parent=39 // pred_fallthru
          _
        %v350 = vld [vmem:[%s281] sm:$0xf]
        %v351 = vld [vmem:[%s281 + $0x4] sm:$0xf]
        %v352 = vld [vmem:[%s281 + $0x8] sm:$0xf]
        %v353 = vld [vmem:[%s281 + $0xc] sm:$0xf]
        %v354 = vld [vmem:[%s281 + $0x10] sm:$0xf]
        %v355 = vld [vmem:[%s281 + $0x14] sm:$0xf]
        %v356 = vld [vmem:[%s281 + $0x18] sm:$0xf]
        %v357 = vld [vmem:[%s281 + $0x1c] sm:$0xf]
        %v358 = vld [vmem:[#allocation6] sm:$0xff]
        %v359 = vld [vmem:[#allocation6 + $0x8] sm:$0xff]
        %v360 = vld [vmem:[#allocation6 + $0x10] sm:$0xff]
        %v361 = vld [vmem:[#allocation6 + $0x18] sm:$0xff]
        %v362 = vld [vmem:[#allocation6 + $0x20] sm:$0xff]
        %v363 = vld [vmem:[#allocation6 + $0x28] sm:$0xff]
        %v364 = vld [vmem:[#allocation6 + $0x30] sm:$0xff]
        %v365 = vld [vmem:[#allocation6 + $0x38] sm:$0xff]
        %v366 = vld [vmem:[#allocation6 + $0x40] sm:$0xff]
        %v367 = vld [vmem:[#allocation6 + $0x48] sm:$0xff]
        %v368 = vld [vmem:[#allocation6 + $0x50] sm:$0xff]
        %v369 = vld [vmem:[#allocation6 + $0x58] sm:$0xff]
        %v370 = vld [vmem:[#allocation6 + $0x60] sm:$0xff]
        %v371 = vld [vmem:[#allocation6 + $0x68] sm:$0xff]
        %v372 = vld [vmem:[#allocation6 + $0x70] sm:$0xff]
        %v373 = vld [vmem:[#allocation6 + $0x78] sm:$0xff]
        %v374 = vld [vmem:[%s329] sm:$0x3]
        %v376 = vlaneseq
        %v377 = vshrl.u32 %v376, 7
        %v378 = vsub.s32 0, %v377
        %v379 = vrot.slane %v374, %v378
        %v380 = vlaneseq
        %v381 = vshrl.u32 %v380, 7
        %v382 = vsub.s32 1, %v381
        %v383 = vrot.slane %v374, %v382
        %v394 = vunpack.c.l.b16 %v350
        %v395 = vunpack.c.l.b16 %v351
        %v396 = vunpack.c.l.b16 %v352
        %v397 = vunpack.c.l.b16 %v353
        %v398 = vunpack.c.l.b16 %v354
        %v399 = vunpack.c.l.b16 %v355
        %v400 = vunpack.c.l.b16 %v356
        %v401 = vunpack.c.l.b16 %v357
        %v402 = vpack.c.b16 %v395, %v394
        %v403 = vpack.c.b16 %v397, %v396
        %v404 = vpack.c.b16 %v399, %v398
        %v405 = vpack.c.b16 %v401, %v400
        %v426 = vunpack.c.l.b16 %v358
        %v427 = vunpack.c.h.b16 %v358
        %v428 = vunpack.c.l.b16 %v359
        %v429 = vunpack.c.h.b16 %v359
        %v430 = vunpack.c.l.b16 %v360
        %v431 = vunpack.c.h.b16 %v360
        %v432 = vunpack.c.l.b16 %v361
        %v433 = vunpack.c.h.b16 %v361
        %v434 = vunpack.c.l.b16 %v362
        %v435 = vunpack.c.h.b16 %v362
        %v436 = vunpack.c.l.b16 %v363
        %v437 = vunpack.c.h.b16 %v363
        %v438 = vunpack.c.l.b16 %v364
        %v439 = vunpack.c.h.b16 %v364
        %v440 = vunpack.c.l.b16 %v365
        %v441 = vunpack.c.h.b16 %v365
        %v442 = vunpack.c.l.b16 %v366
        %v443 = vunpack.c.h.b16 %v366
        %v444 = vunpack.c.l.b16 %v367
        %v445 = vunpack.c.h.b16 %v367
        %v446 = vunpack.c.l.b16 %v368
        %v447 = vunpack.c.h.b16 %v368
        %v448 = vunpack.c.l.b16 %v369
        %v449 = vunpack.c.h.b16 %v369
        %v450 = vunpack.c.l.b16 %v370
        %v451 = vunpack.c.h.b16 %v370
        %v452 = vunpack.c.l.b16 %v371
        %v453 = vunpack.c.h.b16 %v371
        %v454 = vunpack.c.l.b16 %v372
        %v455 = vunpack.c.h.b16 %v372
        %v456 = vunpack.c.l.b16 %v373
        %v457 = vunpack.c.h.b16 %v373
        %v458 = vpack.c.b16 %v428, %v426
        %v459 = vpack.c.b16 %v429, %v427
        %v460 = vpack.c.b16 %v432, %v430
        %v461 = vpack.c.b16 %v433, %v431
        %v462 = vpack.c.b16 %v436, %v434
        %v463 = vpack.c.b16 %v437, %v435
        %v464 = vpack.c.b16 %v440, %v438
        %v465 = vpack.c.b16 %v441, %v439
        %v466 = vpack.c.b16 %v444, %v442
        %v467 = vpack.c.b16 %v445, %v443
        %v468 = vpack.c.b16 %v448, %v446
        %v469 = vpack.c.b16 %v449, %v447
        %v470 = vpack.c.b16 %v452, %v450
        %v471 = vpack.c.b16 %v453, %v451
        %v472 = vpack.c.b16 %v456, %v454
        %v473 = vpack.c.b16 %v457, %v455
        %490 = vmatprep.subr.bf16.mxu0 %v459
        %491 = vmatpush1.bf16.msra.mxu0 %v458
        %492 = vmatprep.subr.bf16.mxu0 %v461
        %493 = vmatpush1.bf16.msra.mxu0 %v460
        %494 = vmatprep.subr.bf16.mxu0 %v463
        %495 = vmatpush1.bf16.msra.mxu0 %v462
        %496 = vmatprep.subr.bf16.mxu0 %v465
        %497 = vmatpush1.bf16.msra.mxu0 %v464
        %498 = vmatprep.subr.bf16.mxu0 %v467
        %499 = vmatpush1.bf16.msra.mxu0 %v466
        %500 = vmatprep.subr.bf16.mxu0 %v469
        %501 = vmatpush1.bf16.msra.mxu0 %v468
        %502 = vmatprep.subr.bf16.mxu0 %v471
        %503 = vmatpush1.bf16.msra.mxu0 %v470
        %504 = vmatprep.subr.bf16.mxu0 %v473
        %505 = vmatpush1.bf16.msra.mxu0 %v472
        %506 = vmatprep.subr.bf16.mxu0 0
        %507 = vmatpush1.bf16.msra.mxu0 0
        %508 = vmatprep.subr.bf16.mxu0 0
        %509 = vmatpush1.bf16.msra.mxu0 0
        %510 = vmatprep.subr.bf16.mxu0 0
        %511 = vmatpush1.bf16.msra.mxu0 0
        %512 = vmatprep.subr.bf16.mxu0 0
        %513 = vmatpush1.bf16.msra.mxu0 0
        %514 = vmatprep.subr.bf16.mxu0 0
        %515 = vmatpush1.bf16.msra.mxu0 0
        %516 = vmatprep.subr.bf16.mxu0 0
        %517 = vmatpush1.bf16.msra.mxu0 0
        %518 = vmatprep.subr.bf16.mxu0 0
        %519 = vmatpush1.bf16.msra.mxu0 0
        %520 = vmatprep.subr.bf16.mxu0 0
        %521 = vmatpush1.bf16.msra.mxu0 0
        %522 = vmatprep.mubr.bf16.mxu0 0
        %523 = vmatmul.mubr.bf16.gmra.mrb[0].mxu0 %v402
        %v524 = vpop.f32.mrb[0].mxu0
        %v525 = vadd.f32 %v379, %v524
        %v526 = vpop.f32.mrb[0].mxu0
        %v527 = vadd.f32 %v383, %v526
        %v528 = vpop.f32.mrb[0].mxu0
        %v529 = vadd.f32 %v379, %v528
        %v530 = vpop.f32.mrb[0].mxu0
        %v531 = vadd.f32 %v383, %v530
        %532 = vmatprep.mubr.bf16.mxu0 0
        %533 = vmatmul.mubr.bf16.gmra.mrb[0].mxu0 %v403
        %v534 = vpop.f32.mrb[0].mxu0
        %v535 = vadd.f32 %v379, %v534
        %v536 = vpop.f32.mrb[0].mxu0
        %v537 = vadd.f32 %v383, %v536
        %v538 = vpop.f32.mrb[0].mxu0
        %v539 = vadd.f32 %v379, %v538
        %v540 = vpop.f32.mrb[0].mxu0
        %v541 = vadd.f32 %v383, %v540
        %542 = vmatprep.mubr.bf16.mxu0 0
        %543 = vmatmul.mubr.bf16.gmra.mrb[0].mxu0 %v404
        %v544 = vpop.f32.mrb[0].mxu0
        %v545 = vadd.f32 %v379, %v544
        %v546 = vpop.f32.mrb[0].mxu0
        %v547 = vadd.f32 %v383, %v546
        %v548 = vpop.f32.mrb[0].mxu0
        %v549 = vadd.f32 %v379, %v548
        %v550 = vpop.f32.mrb[0].mxu0
        %v551 = vadd.f32 %v383, %v550
        %552 = vmatprep.mubr.bf16.mxu0 0
        %553 = vmatmul.mubr.bf16.gmra.mrb[0].mxu0 %v405
        %v554 = vpop.f32.mrb[0].mxu0
        %v555 = vadd.f32 %v379, %v554
        %v556 = vpop.f32.mrb[0].mxu0
        %v557 = vadd.f32 %v383, %v556
        %v558 = vpop.f32.mrb[0].mxu0
        %v559 = vadd.f32 %v379, %v558
        %v560 = vpop.f32.mrb[0].mxu0
        %v561 = vadd.f32 %v383, %v560
        %562 = vdwg.mxu0
        %v563 = vmul.f32 %v525, %v525
        %v564 = vmul.f32 %v527, %v527
        %v565 = vmul.f32 %v529, %v529
        %v566 = vmul.f32 %v531, %v531
        %v567 = vmul.f32 %v535, %v535
        %v568 = vmul.f32 %v537, %v537
        %v569 = vmul.f32 %v539, %v539
        %v570 = vmul.f32 %v541, %v541
        %v571 = vmul.f32 %v545, %v545
        %v572 = vmul.f32 %v547, %v547
        %v573 = vmul.f32 %v549, %v549
        %v574 = vmul.f32 %v551, %v551
        %v575 = vmul.f32 %v555, %v555
        %v576 = vmul.f32 %v557, %v557
        %v577 = vmul.f32 %v559, %v559
        %v578 = vmul.f32 %v561, %v561
        %v579 = vmul.f32 %v525, %v563
        %v580 = vmul.f32 %v527, %v564
        %v581 = vmul.f32 %v529, %v565
        %v582 = vmul.f32 %v531, %v566
        %v583 = vmul.f32 %v535, %v567
        %v584 = vmul.f32 %v537, %v568
        %v585 = vmul.f32 %v539, %v569
        %v586 = vmul.f32 %v541, %v570
        %v587 = vmul.f32 %v545, %v571
        %v588 = vmul.f32 %v547, %v572
        %v589 = vmul.f32 %v549, %v573
        %v590 = vmul.f32 %v551, %v574
        %v591 = vmul.f32 %v555, %v575
        %v592 = vmul.f32 %v557, %v576
        %v593 = vmul.f32 %v559, %v577
        %v594 = vmul.f32 %v561, %v578
        %v595 = vmul.f32 %v579, 0.044715
        %v596 = vmul.f32 %v580, 0.044715
        %v597 = vmul.f32 %v581, 0.044715
        %v598 = vmul.f32 %v582, 0.044715
        %v599 = vmul.f32 %v583, 0.044715
        %v600 = vmul.f32 %v584, 0.044715
        %v601 = vmul.f32 %v585, 0.044715
        %v602 = vmul.f32 %v586, 0.044715
        %v603 = vmul.f32 %v587, 0.044715
        %v604 = vmul.f32 %v588, 0.044715
        %v605 = vmul.f32 %v589, 0.044715
        %v606 = vmul.f32 %v590, 0.044715
        %v607 = vmul.f32 %v591, 0.044715
        %v608 = vmul.f32 %v592, 0.044715
        %v609 = vmul.f32 %v593, 0.044715
        %v610 = vmul.f32 %v594, 0.044715
        %v611 = vadd.f32 %v525, %v595
        %v612 = vadd.f32 %v527, %v596
        %v613 = vadd.f32 %v529, %v597
        %v614 = vadd.f32 %v531, %v598
        %v615 = vadd.f32 %v535, %v599
        %v616 = vadd.f32 %v537, %v600
        %v617 = vadd.f32 %v539, %v601
        %v618 = vadd.f32 %v541, %v602
        %v619 = vadd.f32 %v545, %v603
        %v620 = vadd.f32 %v547, %v604
        %v621 = vadd.f32 %v549, %v605
        %v622 = vadd.f32 %v551, %v606
        %v623 = vadd.f32 %v555, %v607
        %v624 = vadd.f32 %v557, %v608
        %v625 = vadd.f32 %v559, %v609
        %v626 = vadd.f32 %v561, %v610
        %v627 = vmul.f32 %v611, 0.7978846
        %v628 = vmul.f32 %v612, 0.7978846
        %v629 = vmul.f32 %v613, 0.7978846
        %v630 = vmul.f32 %v614, 0.7978846
        %v631 = vmul.f32 %v615, 0.7978846
        %v632 = vmul.f32 %v616, 0.7978846
        %v633 = vmul.f32 %v617, 0.7978846
        %v634 = vmul.f32 %v618, 0.7978846
        %v635 = vmul.f32 %v619, 0.7978846
        %v636 = vmul.f32 %v620, 0.7978846
        %v637 = vmul.f32 %v621, 0.7978846
        %v638 = vmul.f32 %v622, 0.7978846
        %v639 = vmul.f32 %v623, 0.7978846
        %v640 = vmul.f32 %v624, 0.7978846
        %v641 = vmul.f32 %v625, 0.7978846
        %v642 = vmul.f32 %v626, 0.7978846
        %v643 = vtanh.pop %v627
        %v644 = vtanh.pop %v628
        %v645 = vtanh.pop %v629
        %v646 = vtanh.pop %v630
        %v647 = vtanh.pop %v631
        %v648 = vtanh.pop %v632
        %v649 = vtanh.pop %v633
        %v650 = vtanh.pop %v634
        %v651 = vtanh.pop %v635
        %v652 = vtanh.pop %v636
        %v653 = vtanh.pop %v637
        %v654 = vtanh.pop %v638
        %v655 = vtanh.pop %v639
        %v656 = vtanh.pop %v640
        %v657 = vtanh.pop %v641
        %v658 = vtanh.pop %v642
        %v659 = vadd.f32 %v643, 1.0
        %v660 = vadd.f32 %v644, 1.0
        %v661 = vadd.f32 %v645, 1.0
        %v662 = vadd.f32 %v646, 1.0
        %v663 = vadd.f32 %v647, 1.0
        %v664 = vadd.f32 %v648, 1.0
        %v665 = vadd.f32 %v649, 1.0
        %v666 = vadd.f32 %v650, 1.0
        %v667 = vadd.f32 %v651, 1.0
        %v668 = vadd.f32 %v652, 1.0
        %v669 = vadd.f32 %v653, 1.0
        %v670 = vadd.f32 %v654, 1.0
        %v671 = vadd.f32 %v655, 1.0
        %v672 = vadd.f32 %v656, 1.0
        %v673 = vadd.f32 %v657, 1.0
        %v674 = vadd.f32 %v658, 1.0
        %v675 = vmul.f32 %v659, 0.5
        %v676 = vmul.f32 %v660, 0.5
        %v677 = vmul.f32 %v661, 0.5
        %v678 = vmul.f32 %v662, 0.5
        %v679 = vmul.f32 %v663, 0.5
        %v680 = vmul.f32 %v664, 0.5
        %v681 = vmul.f32 %v665, 0.5
        %v682 = vmul.f32 %v666, 0.5
        %v683 = vmul.f32 %v667, 0.5
        %v684 = vmul.f32 %v668, 0.5
        %v685 = vmul.f32 %v669, 0.5
        %v686 = vmul.f32 %v670, 0.5
        %v687 = vmul.f32 %v671, 0.5
        %v688 = vmul.f32 %v672, 0.5
        %v689 = vmul.f32 %v673, 0.5
        %v690 = vmul.f32 %v674, 0.5
        %v691 = vmul.f32 %v525, %v675
        %v692 = vmul.f32 %v527, %v676
        %v693 = vmul.f32 %v529, %v677
        %v694 = vmul.f32 %v531, %v678
        %v695 = vmul.f32 %v535, %v679
        %v696 = vmul.f32 %v537, %v680
        %v697 = vmul.f32 %v539, %v681
        %v698 = vmul.f32 %v541, %v682
        %v699 = vmul.f32 %v545, %v683
        %v700 = vmul.f32 %v547, %v684
        %v701 = vmul.f32 %v549, %v685
        %v702 = vmul.f32 %v551, %v686
        %v703 = vmul.f32 %v555, %v687
        %v704 = vmul.f32 %v557, %v688
        %v705 = vmul.f32 %v559, %v689
        %v706 = vmul.f32 %v561, %v690
        %v707 = vpack.c.bf16 %v693, %v691
        %v708 = vpack.c.bf16 %v694, %v692
        %v709 = vpack.c.bf16 %v697, %v695
        %v710 = vpack.c.bf16 %v698, %v696
        %v711 = vpack.c.bf16 %v701, %v699
        %v712 = vpack.c.bf16 %v702, %v700
        %v713 = vpack.c.bf16 %v705, %v703
        %v714 = vpack.c.bf16 %v706, %v704
        %v715 = vld [vmem:[#allocation2] sm:$0xff]
        %v716 = vld [vmem:[#allocation2 + $0x8] sm:$0xff]
        %v717 = vld [vmem:[#allocation2 + $0x10] sm:$0xff]
        %v718 = vld [vmem:[#allocation2 + $0x18] sm:$0xff]
        %v719 = vld [vmem:[#allocation2 + $0x20] sm:$0xff]
        %v720 = vld [vmem:[#allocation2 + $0x28] sm:$0xff]
        %v721 = vld [vmem:[#allocation2 + $0x30] sm:$0xff]
        %v722 = vld [vmem:[#allocation2 + $0x38] sm:$0xff]
        %v723 = vld [vmem:[#allocation8] sm:$0xf]
        %v724 = vld [vmem:[#allocation8 + $0x4] sm:$0xf]
        %v725 = vld [vmem:[#allocation8 + $0x8] sm:$0xf]
        %v726 = vld [vmem:[#allocation8 + $0xc] sm:$0xf]
        %v727 = vld [vmem:[#allocation8 + $0x10] sm:$0xf]
        %v728 = vld [vmem:[#allocation8 + $0x14] sm:$0xf]
        %v729 = vld [vmem:[#allocation8 + $0x18] sm:$0xf]
        %v730 = vld [vmem:[#allocation8 + $0x1c] sm:$0xf]
        %v731 = vld [vmem:[#allocation8 + $0x20] sm:$0xf]
        %v732 = vld [vmem:[#allocation8 + $0x24] sm:$0xf]
        %v733 = vld [vmem:[#allocation8 + $0x28] sm:$0xf]
        %v734 = vld [vmem:[#allocation8 + $0x2c] sm:$0xf]
        %v735 = vld [vmem:[#allocation8 + $0x30] sm:$0xf]
        %v736 = vld [vmem:[#allocation8 + $0x34] sm:$0xf]
        %v737 = vld [vmem:[#allocation8 + $0x38] sm:$0xf]
        %v738 = vld [vmem:[#allocation8 + $0x3c] sm:$0xf]
        %v739 = vld [vmem:[#allocation8 + $0x40] sm:$0xf]
        %v740 = vld [vmem:[#allocation8 + $0x44] sm:$0xf]
        %v741 = vld [vmem:[#allocation8 + $0x48] sm:$0xf]
        %v742 = vld [vmem:[#allocation8 + $0x4c] sm:$0xf]
        %v743 = vld [vmem:[#allocation8 + $0x50] sm:$0xf]
        %v744 = vld [vmem:[#allocation8 + $0x54] sm:$0xf]
        %v745 = vld [vmem:[#allocation8 + $0x58] sm:$0xf]
        %v746 = vld [vmem:[#allocation8 + $0x5c] sm:$0xf]
        %v747 = vld [vmem:[#allocation8 + $0x60] sm:$0xf]
        %v748 = vld [vmem:[#allocation8 + $0x64] sm:$0xf]
        %v749 = vld [vmem:[#allocation8 + $0x68] sm:$0xf]
        %v750 = vld [vmem:[#allocation8 + $0x6c] sm:$0xf]
        %v751 = vld [vmem:[#allocation8 + $0x70] sm:$0xf]
        %v752 = vld [vmem:[#allocation8 + $0x74] sm:$0xf]
        %v753 = vld [vmem:[#allocation8 + $0x78] sm:$0xf]
        %v754 = vld [vmem:[#allocation8 + $0x7c] sm:$0xf]
        %v787 = vunpack.c.l.b16 %v723
        %v788 = vunpack.c.l.b16 %v724
        %v789 = vunpack.c.l.b16 %v725
        %v790 = vunpack.c.l.b16 %v726
        %v791 = vunpack.c.l.b16 %v727
        %v792 = vunpack.c.l.b16 %v728
        %v793 = vunpack.c.l.b16 %v729
        %v794 = vunpack.c.l.b16 %v730
        %v795 = vunpack.c.l.b16 %v731
        %v796 = vunpack.c.l.b16 %v732
        %v797 = vunpack.c.l.b16 %v733
        %v798 = vunpack.c.l.b16 %v734
        %v799 = vunpack.c.l.b16 %v735
        %v800 = vunpack.c.l.b16 %v736
        %v801 = vunpack.c.l.b16 %v737
        %v802 = vunpack.c.l.b16 %v738
        %v803 = vunpack.c.l.b16 %v739
        %v804 = vunpack.c.l.b16 %v740
        %v805 = vunpack.c.l.b16 %v741
        %v806 = vunpack.c.l.b16 %v742
        %v807 = vunpack.c.l.b16 %v743
        %v808 = vunpack.c.l.b16 %v744
        %v809 = vunpack.c.l.b16 %v745
        %v810 = vunpack.c.l.b16 %v746
        %v811 = vunpack.c.l.b16 %v747
        %v812 = vunpack.c.l.b16 %v748
        %v813 = vunpack.c.l.b16 %v749
        %v814 = vunpack.c.l.b16 %v750
        %v815 = vunpack.c.l.b16 %v751
        %v816 = vunpack.c.l.b16 %v752
        %v817 = vunpack.c.l.b16 %v753
        %v818 = vunpack.c.l.b16 %v754
        %v819 = vpack.c.b16 %v788, %v787
        %v820 = vpack.c.b16 %v790, %v789
        %v821 = vpack.c.b16 %v792, %v791
        %v822 = vpack.c.b16 %v794, %v793
        %v823 = vpack.c.b16 %v796, %v795
        %v824 = vpack.c.b16 %v798, %v797
        %v825 = vpack.c.b16 %v800, %v799
        %v826 = vpack.c.b16 %v802, %v801
        %v827 = vpack.c.b16 %v804, %v803
        %v828 = vpack.c.b16 %v806, %v805
        %v829 = vpack.c.b16 %v808, %v807
        %v830 = vpack.c.b16 %v810, %v809
        %v831 = vpack.c.b16 %v812, %v811
        %v832 = vpack.c.b16 %v814, %v813
        %v833 = vpack.c.b16 %v816, %v815
        %v834 = vpack.c.b16 %v818, %v817
        %851 = vmatprep.subr.bf16.mxu0 0
        %852 = vmatpush1.bf16.msra.mxu0 %v819
        %853 = vmatprep.subr.bf16.mxu0 0
        %854 = vmatpush1.bf16.msra.mxu0 %v820
        %855 = vmatprep.subr.bf16.mxu0 0
        %856 = vmatpush1.bf16.msra.mxu0 %v821
        %857 = vmatprep.subr.bf16.mxu0 0
        %858 = vmatpush1.bf16.msra.mxu0 %v822
        %859 = vmatprep.subr.bf16.mxu0 0
        %860 = vmatpush1.bf16.msra.mxu0 %v823
        %861 = vmatprep.subr.bf16.mxu0 0
        %862 = vmatpush1.bf16.msra.mxu0 %v824
        %863 = vmatprep.subr.bf16.mxu0 0
        %864 = vmatpush1.bf16.msra.mxu0 %v825
        %865 = vmatprep.subr.bf16.mxu0 0
        %866 = vmatpush1.bf16.msra.mxu0 %v826
        %867 = vmatprep.subr.bf16.mxu0 0
        %868 = vmatpush1.bf16.msra.mxu0 %v827
        %869 = vmatprep.subr.bf16.mxu0 0
        %870 = vmatpush1.bf16.msra.mxu0 %v828
        %871 = vmatprep.subr.bf16.mxu0 0
        %872 = vmatpush1.bf16.msra.mxu0 %v829
        %873 = vmatprep.subr.bf16.mxu0 0
        %874 = vmatpush1.bf16.msra.mxu0 %v830
        %875 = vmatprep.subr.bf16.mxu0 0
        %876 = vmatpush1.bf16.msra.mxu0 %v831
        %877 = vmatprep.subr.bf16.mxu0 0
        %878 = vmatpush1.bf16.msra.mxu0 %v832
        %879 = vmatprep.subr.bf16.mxu0 0
        %880 = vmatpush1.bf16.msra.mxu0 %v833
        %881 = vmatprep.subr.bf16.mxu0 0
        %882 = vmatpush1.bf16.msra.mxu0 %v834
        %883 = vmatprep.mubr.bf16.mxu0 %v708
        %884 = vmatmul.mubr.bf16.gmra.mrb[0].mxu0 %v707
        %v885 = vpop.f32.mrb[0].mxu0
        %v886 = vadd.f32 0.0, %v885
        %v887 = vpop.f32.mrb[0].mxu0
        %v888 = vpop.f32.mrb[0].mxu0
        %v889 = vadd.f32 0.0, %v888
        %v890 = vpop.f32.mrb[0].mxu0
        %891 = vmatprep.mubr.bf16.mxu0 %v710
        %892 = vmatmul.mubr.bf16.gmra.mrb[0].mxu0 %v709
        %v893 = vpop.f32.mrb[0].mxu0
        %v894 = vadd.f32 0.0, %v893
        %v895 = vpop.f32.mrb[0].mxu0
        %v896 = vpop.f32.mrb[0].mxu0
        %v897 = vadd.f32 0.0, %v896
        %v898 = vpop.f32.mrb[0].mxu0
        %899 = vmatprep.mubr.bf16.mxu0 %v712
        %900 = vmatmul.mubr.bf16.gmra.mrb[0].mxu0 %v711
        %v901 = vpop.f32.mrb[0].mxu0
        %v902 = vadd.f32 0.0, %v901
        %v903 = vpop.f32.mrb[0].mxu0
        %v904 = vpop.f32.mrb[0].mxu0
        %v905 = vadd.f32 0.0, %v904
        %v906 = vpop.f32.mrb[0].mxu0
        %907 = vmatprep.mubr.bf16.mxu0 %v714
        %908 = vmatmul.mubr.bf16.gmra.mrb[0].mxu0 %v713
        %v909 = vpop.f32.mrb[0].mxu0
        %v910 = vadd.f32 0.0, %v909
        %v911 = vpop.f32.mrb[0].mxu0
        %v912 = vpop.f32.mrb[0].mxu0
        %v913 = vadd.f32 0.0, %v912
        %v914 = vpop.f32.mrb[0].mxu0
        %915 = vdwg.mxu0
        %v916 = vadd.f32 %v715, %v886
        %v917 = vadd.f32 %v716, %v889
        %v918 = vadd.f32 %v717, %v894
        %v919 = vadd.f32 %v718, %v897
        %v920 = vadd.f32 %v719, %v902
        %v921 = vadd.f32 %v720, %v905
        %v922 = vadd.f32 %v721, %v910
        %v923 = vadd.f32 %v722, %v913
        %924 = vst [vmem:[#allocation2] sm:$0xff] %v916
        %925 = vst [vmem:[#allocation2 + $0x8] sm:$0xff] %v917
        %926 = vst [vmem:[#allocation2 + $0x10] sm:$0xff] %v918
        %927 = vst [vmem:[#allocation2 + $0x18] sm:$0xff] %v919
        %928 = vst [vmem:[#allocation2 + $0x20] sm:$0xff] %v920
        %929 = vst [vmem:[#allocation2 + $0x28] sm:$0xff] %v921
        %930 = vst [vmem:[#allocation2 + $0x30] sm:$0xff] %v922
        %931 = vst [vmem:[#allocation2 + $0x38] sm:$0xff] %v923
        // Predicated region
        $region57: #{tpu_custom_call.1} parent=39 // pred_check
          %p932 = pneg %p338
        $region58: #{tpu_custom_call.1} parent=39 // pred_check_branch
          %934 = sbr.rel (%p932) target = $region60
        $region59: #{tpu_custom_call.1} parent=39 // pred_region
          %v935 = vld [vmem:[#allocation2] sm:$0xff]
          %v936 = vld [vmem:[#allocation2 + $0x8] sm:$0xff]
          %v937 = vld [vmem:[#allocation2 + $0x10] sm:$0xff]
          %v938 = vld [vmem:[#allocation2 + $0x18] sm:$0xff]
          %v939 = vld [vmem:[#allocation2 + $0x20] sm:$0xff]
          %v940 = vld [vmem:[#allocation2 + $0x28] sm:$0xff]
          %v941 = vld [vmem:[#allocation2 + $0x30] sm:$0xff]
          %v942 = vld [vmem:[#allocation2 + $0x38] sm:$0xff]
          %v943 = vld [vmem:[%s4] sm:$0x1]
          %v945 = vlaneseq
          %v946 = vshrl.u32 %v945, 7
          %v947 = vsub.s32 0, %v946
          %v948 = vrot.slane %v943, %v947
          %v950 = vadd.f32 %v935, %v948
          %v951 = vadd.f32 %v936, %v948
          %v952 = vadd.f32 %v937, %v948
          %v953 = vadd.f32 %v938, %v948
          %v954 = vadd.f32 %v939, %v948
          %v955 = vadd.f32 %v940, %v948
          %v956 = vadd.f32 %v941, %v948
          %v957 = vadd.f32 %v942, %v948
          %v958 = vpack.c.bf16 %v951, %v950
          %v959 = vpack.c.bf16 %v953, %v952
          %v960 = vpack.c.bf16 %v955, %v954
          %v961 = vpack.c.bf16 %v957, %v956
          %v966 = vunpack.c.l.b16 %v958
          %v967 = vunpack.c.h.b16 %v958
          %v968 = vunpack.c.l.b16 %v959
          %v969 = vunpack.c.h.b16 %v959
          %v970 = vunpack.c.l.b16 %v960
          %v971 = vunpack.c.h.b16 %v960
          %v972 = vunpack.c.l.b16 %v961
          %v973 = vunpack.c.h.b16 %v961
          %v974 = vpack.c.b16 %v966, %v966
          %v975 = vpack.c.b16 %v967, %v967
          %v976 = vpack.c.b16 %v968, %v968
          %v977 = vpack.c.b16 %v969, %v969
          %v978 = vpack.c.b16 %v970, %v970
          %v979 = vpack.c.b16 %v971, %v971
          %v980 = vpack.c.b16 %v972, %v972
          %v981 = vpack.c.b16 %v973, %v973
          %990 = vst [vmem:[%s319] sm:$0xf] %v974
          %991 = vst [vmem:[%s319 + $0x4] sm:$0xf] %v975
          %992 = vst [vmem:[%s319 + $0x8] sm:$0xf] %v976
          %993 = vst [vmem:[%s319 + $0xc] sm:$0xf] %v977
          %994 = vst [vmem:[%s319 + $0x10] sm:$0xf] %v978
          %995 = vst [vmem:[%s319 + $0x14] sm:$0xf] %v979
          %996 = vst [vmem:[%s319 + $0x18] sm:$0xf] %v980
          %997 = vst [vmem:[%s319 + $0x1c] sm:$0xf] %v981
        $region60: #{tpu_custom_call.1} parent=39 // pred_fallthru
          _
        %s998 = sand.u32 %s168, 1
        %s999 = scalar_lea.sflag [#allocation5], %s998
        %s1000 = sand.u32 %s168, 1
        %s1001 = smul.addr %s1000, 32
        %s1002 = scalar_lea.vmem [#allocation9], %s1001
        // Predicated region
        $region61: #{tpu_custom_call.1} parent=39 // pred_check
          %p1003 = pneg %p178
        $region62: #{tpu_custom_call.1} parent=39 // pred_check_branch
          %1005 = sbr.rel (%p1003) target = $region64
        $region63: #{tpu_custom_call.1} parent=39 // pred_region
          %s1006 = smul.u32 8, %s27
          %s1007 = ssub.s32 13, %s1006
          %p1008 = scmp.lt.s32.totalorder %s1007, 8
          %s1009 = scalar_select %p1008, %s1007, 8
          %s1010 = smul.u32 64, %s1009
          %s1012 = ssub.s32 512, %s1010
          %1013 = vsyncadd %s999, %s1012
          %p1014 = scmp.ne.s32.totalorder 0, %s1010
          %s1015 = smul.addr %s1006, 64
          %s1016 = scalar_lea.hbm %s5, %s1015
          %s1017 = smul.u32 4, %s1009
          %s1018 = sshll.u32 %s1002, 4
          %s1019 = int_to_ptr.vmem [resolvable:$true] %s1018
          %s1020 = sshll.u32 %s1017, 4
          %1024 = dma.vmem_to_hbm [thread:$0]  (%p1014), %s1019, %s1020, %s1016, %s999, 64, 64, 4
        $region64: #{tpu_custom_call.1} parent=39 // pred_fallthru
          _
      $region40: #{tpu_custom_call.1} parent=5 // pred_fallthru
        _
      %p1025 = scmp.le.s32.totalorder 2, %s18
      // Predicated region
      $region65: #{tpu_custom_call.1} parent=5 // pred_check
        %p1026 = pneg %p1025
      $region66: #{tpu_custom_call.1} parent=5 // pred_check_branch
        %1028 = sbr.rel (%p1026) target = $region68
      $region67: #{tpu_custom_call.1} parent=5 // pred_region
        %s1029 = ssub.s32 %s18, 2
        // Predicated region
        $region69: #{tpu_custom_call.1} parent=67 // pred_check
          %p1030 = pneg %p184
        $region70: #{tpu_custom_call.1} parent=67 // pred_check_branch
          %1032 = sbr.rel (%p1030) target = $region72
        $region71: #{tpu_custom_call.1} parent=67 // pred_region
          %s1033 = sand.u32 %s169, 1
          %s1034 = scalar_lea.sflag [#allocation5], %s1033
          %s1035 = sand.u32 %s169, 1
          %s1036 = smul.addr %s1035, 32
          %s1037 = scalar_lea.vmem [#allocation9], %s1036
          %1038 = dma.done %s1034, 512
        $region72: #{tpu_custom_call.1} parent=67 // pred_fallthru
          _
      $region68: #{tpu_custom_call.1} parent=5 // pred_fallthru
        _
    $region6: #{tpu_custom_call.1} parent=1 // loop_footer
      %s22 = sadd.s32 1, %s18
    $region7: #{tpu_custom_call.1} parent=1 // loop_footer_branch
      %17 = sbr.rel target = $region3
    $region8: #{tpu_custom_call.1} parent=1 // loop_exit
      _
    %1039 = vsyncpa [#allocation4], 1
    %s1040 = scalar_lea.sflag [#allocation4], 1
    %1041 = vsyncpa %s1040, 1
    %1042 = vsyncpa [#allocation7], 1
    %1043 = vsyncpa [#allocation5], 1
    %s1044 = scalar_lea.sflag [#allocation5], 1
    %1045 = vsyncpa %s1044, 1

</llo_original>
